<compile_context>
chip_gen: v7x
topology: tpu7x:2x2x1
jax: 0.10.0
libtpu: 0.0.40
codegen_flags: <defaults>
</compile_context>

<pallas_src>
import math

import jax
import jax.numpy as jnp
from jax.experimental import pallas as pl
from jax.experimental.pallas import tpu as pltpu


def _cdiv(a, b):
    return (a + b - 1) // b


def _round_up(a, b):
    return _cdiv(a, b) * b


def _chip_info():
    """Returns (is_v7x, physical_vmem_bytes) with safe fallbacks."""
    kind = ""
    try:
        kind = jax.devices()[0].device_kind.lower()
    except Exception:
        pass
    is_v7 = ("v7" in kind) or ("tpu7" in kind)
    phys_vmem = None
    try:
        phys_vmem = int(getattr(pltpu.get_tpu_info(), "vmem_capacity_bytes"))
    except Exception:
        phys_vmem = None
    if not phys_vmem or phys_vmem <= 0:
        phys_vmem = (64 << 20) if is_v7 else (128 << 20)
    return is_v7, phys_vmem


# ---------------------------------------------------------------------------
# Kernel 1: per-split partial Gram matrices  G_s = sum_i X_{s,i}^T X_{s,i}
# (one resident (D, D) accumulator per split; split axis is "parallel").
# Ragged / overshoot tiles are masked in-kernel (no jnp.pad copy of X).
# ---------------------------------------------------------------------------
def _make_gram_kernel(precision):
    def kernel(valid_ref, x_ref, o_ref):
        @pl.when(pl.program_id(1) == 0)
        def _init():
            o_ref[...] = jnp.zeros_like(o_ref)

        tn = x_ref.shape[0]
        tile_idx = pl.program_id(0) * pl.num_programs(1) + pl.program_id(1)
        row0 = tile_idx * tn
        valid = valid_ref[0]

        def _accum(xb):
            # Contract dim 0 with dim 0 -> xb^T @ xb (no in-kernel transpose).
            o_ref[...] += jax.lax.dot_general(
                xb, xb,
                dimension_numbers=(((0,), (0,)), ((), ())),
                preferred_element_type=jnp.float32,
                precision=precision,
            )

        # Common path: tile fully inside the valid rows (no mask, no temp).
        @pl.when(row0 + tn <= valid)
        def _full():
            _accum(x_ref[...])

        # Ragged last tile (or fully out-of-range overshoot tile from the
        # split rounding): zero the invalid rows before the dot.
        @pl.when(row0 + tn > valid)
        def _ragged():
            row_ids = jax.lax.broadcasted_iota(jnp.int32, x_ref.shape, 0) + row0
            _accum(jnp.where(row_ids < valid, x_ref[...], 0.0))

    return kernel


def _partial_grams(x_view, valid_rows, tn, num_splits, vmem_ceiling, precision):
    rows, D = x_view.shape
    total_tiles = _cdiv(rows, tn)
    tiles_per_split = _cdiv(total_tiles, num_splits)
    last_tile = total_tiles - 1

    def x_map(s, i, valid_ref):
        # Overshoot tiles are clamped onto the last real block; the kernel
        # masks them to a zero contribution.
        return (jnp.minimum(s * tiles_per_split + i, last_tile), 0)

    # 2x double-buffered input + masked-tile temp + 2x (D, D) accumulator.
    need = 3 * tn * D * 4 + 2 * D * D * 4 + (2 << 20)
    vmem_limit = int(min(vmem_ceiling, max(16 << 20, need)))

    return pl.pallas_call(
        _make_gram_kernel(precision),
        out_shape=jax.ShapeDtypeStruct((num_splits, D, D), jnp.float32),
        grid_spec=pltpu.PrefetchScalarGridSpec(
            num_scalar_prefetch=1,
            grid=(num_splits, tiles_per_split),
            in_specs=[
                # TODO(synk): pipeline_mode=pl.Buffered(3) only if a trace
                # shows exposed DMA (wall >> s63) with the bigger tiles.
                pl.BlockSpec((tn, D), x_map),
            ],
            out_specs=pl.BlockSpec((None, D, D),
                                   lambda s, i, valid_ref: (s, 0, 0)),
        ),
        compiler_params=pltpu.CompilerParams(
            dimension_semantics=("parallel", "arbitrary"),
            vmem_limit_bytes=vmem_limit,
        ),
    )(valid_rows, x_view)


# ---------------------------------------------------------------------------
# Kernel 2: lane-dense projection  Y_view = X_view @ Q_blockdiag
# (ragged last block: out-of-bounds output rows are dropped by Pallas).
# ---------------------------------------------------------------------------
def _make_project_kernel(precision):
    def kernel(x_ref, q_ref, o_ref):
        xb = x_ref[...]
        if xb.dtype != q_ref.dtype:
            xb = xb.astype(q_ref.dtype)   # in-kernel cast, no wrapper pass over X
        o_ref[...] = jnp.dot(
            xb, q_ref[...],
            preferred_element_type=jnp.float32,
            precision=precision,
        ).astype(o_ref.dtype)

    return kernel


def _project(x_view, q_big, tn, out_dtype, vmem_ceiling, precision):
    rows, D = x_view.shape
    x_bytes = jnp.dtype(x_view.dtype).itemsize
    o_bytes = jnp.dtype(out_dtype).itemsize
    q_bytes = jnp.dtype(q_big.dtype).itemsize
    # 2x double-buffered input + 2x double-buffered output + Q + slack.
    need = (2 * tn * D * x_bytes + 2 * tn * D * o_bytes
            + 2 * D * D * q_bytes + (2 << 20))
    vmem_limit = int(min(vmem_ceiling, max(16 << 20, need)))

    return pl.pallas_call(
        _make_project_kernel(precision),
        out_shape=jax.ShapeDtypeStruct((rows, D), out_dtype),
        grid_spec=pltpu.PrefetchScalarGridSpec(
            num_scalar_prefetch=0,
            grid=(_cdiv(rows, tn),),
            in_specs=[
                pl.BlockSpec((tn, D), lambda i: (i, 0)),
                pl.BlockSpec((D, D), lambda i: (0, 0)),
            ],
            out_specs=pl.BlockSpec((tn, D), lambda i: (i, 0)),
        ),
        compiler_params=pltpu.CompilerParams(
            dimension_semantics=("parallel",),
            vmem_limit_bytes=vmem_limit,
        ),
    )(x_view, q_big)


# ---------------------------------------------------------------------------
# Full forward pass (matches OrthogonalLayer.forward)
# ---------------------------------------------------------------------------
def orthogonal_layer(x, epsilon=0.0005, num_splits=None, project_dtype=None,
                     precision=None, tile_rows=None):
    """Pallas implementation of OrthogonalLayer.forward.

    num_splits:    leading parallel Gram-reduction split; None -> 2 on v7x
                   (two TensorCores), 1 on v5e/v6e.
    project_dtype: dtype the projection output is written in (the X tile is
                   cast inside the kernel).  None -> float32 (matches the
                   reference exactly).
    precision:     matmul precision; None -> HIGHEST on v5e/v6e (free under
                   the HBM roofline, f32-faithful), DEFAULT on v7x (keeps the
                   Gram pass on the bandwidth roofline).
    tile_rows:     optional cap on the view-row tile size (testing / tuning).
    """
    x = x.astype(jnp.float32)
    n, dim = x.shape

    is_v7, phys_vmem = _chip_info()
    if num_splits is None:
        num_splits = 2 if is_v7 else 1
    num_splits = max(1, int(num_splits))
    if precision is None:
        precision = (jax.lax.Precision.DEFAULT if is_v7
                     else jax.lax.Precision.HIGHEST)
    if project_dtype is None:
        project_dtype = jnp.float32
    project_dtype = jnp.dtype(project_dtype)

    # Generation-aware VMEM ceiling: half the physical capacity
    # (v7x: 32 MiB of 64 MiB; v5e/v6e: 64 MiB of 128 MiB).
    vmem_ceiling = int(min(phys_vmem // 2, 64 << 20))

    # Lane-dense view (n, dim) -> (n/r, r*dim); reduce r until it divides n so
    # the reshape stays a copy-free view.
    r = 128 // dim if (dim < 128 and 128 % dim == 0) else 1
    while r > 1 and n % r != 0:
        r //= 2
    # TODO(synk): for dims that don't divide 128 (e.g. 96, 160) a column-padded
    # lane-dense view (zero rows/cols in Q, sliced output columns) would avoid
    # masked partial-lane stores; not implemented here.
    D = r * dim
    rows = n // r

    # Very large dim: no D-tiled Gram accumulator path yet -> plain XLA fallback.
    if 2 * D * D * 4 + (6 << 20) > vmem_ceiling:
        # TODO(synk): add a D-tiled Gram/projection kernel for dim >~ 2000.
        g = jnp.dot(x.T, x, precision=precision,
                    preferred_element_type=jnp.float32)
        g = g + jnp.eye(dim, dtype=jnp.float32) * jnp.float32(epsilon)
        L = jnp.linalg.cholesky(g)
        L_inv = jax.scipy.linalg.solve_triangular(
            L, jnp.eye(dim, dtype=jnp.float32), lower=True)
        q = L_inv.T * jnp.float32(math.sqrt(n))
        return jnp.dot(x, q, precision=precision).astype(project_dtype)

    # Tile size in view rows: ~8 MiB of f32 per tile, chip-aware so that
    # 2x in-tile + 2x out-tile + Q + slack fits under the VMEM ceiling.
    tile_bytes = min(8 << 20, (vmem_ceiling - (6 << 20)) // 4)
    tn = max(8, (tile_bytes // (D * 4)) // 8 * 8)
    tn = min(tn, _round_up(_cdiv(rows, num_splits), 8))
    if tile_rows is not None:
        tn = min(tn, max(8, (int(tile_rows) // 8) * 8))
    if tn >= rows:
        tn = rows                         # single full block (always legal)

    x_view = x.reshape(rows, D)           # copy-free view (n % r == 0)
    valid_rows = jnp.array([rows], dtype=jnp.int32)

    # Hot path 1 (Pallas): per-split partial Gram matrices of the view.
    g_parts = _partial_grams(x_view, valid_rows, tn, num_splits,
                             vmem_ceiling, precision)
    g_big = g_parts[0] if num_splits == 1 else jnp.sum(g_parts, axis=0)

    # X^T X = sum of the r diagonal (dim, dim) blocks of the view Gram.
    if r > 1:
        g = g_big[0:dim, 0:dim]
        for a in range(1, r):
            g = g + g_big[a * dim:(a + 1) * dim, a * dim:(a + 1) * dim]
    else:
        g = g_big
    g = g + jnp.eye(dim, dtype=jnp.float32) * jnp.float32(epsilon)

    # TODO(synk): the tiny (dim, dim) Cholesky + triangular solve have no clean
    # Pallas TPU equivalent; kept as plain JAX glue.
    L = jnp.linalg.cholesky(g)
    L_inv = jax.scipy.linalg.solve_triangular(
        L, jnp.eye(dim, dtype=jnp.float32), lower=True)
    q = L_inv.T * jnp.float32(math.sqrt(n))

    # Block-diagonal Q so the lane-dense view multiplies directly:
    # (rows, r*dim) @ kron(I_r, Q) is a row-major view of X @ Q.
    q_big = jnp.kron(jnp.eye(r, dtype=jnp.float32), q) if r > 1 else q

    # Hot path 2 (Pallas): lane-dense projection (X stays f32 in HBM; any
    # project_dtype downcast happens on the tile inside the kernel).
    y_view = _project(x_view, q_big.astype(project_dtype), tn,
                      project_dtype, vmem_ceiling, precision)

    return y_view.reshape(n, dim)


# ---------------------------------------------------------------------------
# Reference (f32-faithful, like the PyTorch module) and self-test.
# ---------------------------------------------------------------------------
def _reference(x, epsilon=0.0005, precision=jax.lax.Precision.HIGHEST):
    n, dim = x.shape
    x = x.astype(jnp.float32)
    x2 = jnp.dot(x.T, x, precision=precision) \
        + jnp.eye(dim, dtype=jnp.float32) * epsilon
    L = jnp.linalg.cholesky(x2)
    L_inv = jax.scipy.linalg.solve_triangular(
        L, jnp.eye(dim, dtype=jnp.float32), lower=True)
    q = L_inv.T * math.sqrt(n)
    return jnp.dot(x, q, precision=precision)


if __name__ == "__main__":
    key = jax.random.PRNGKey(0)
    n, dim = 200, 32   # n NOT a multiple of typical tile sizes (ragged path)
    x = jax.random.normal(key, (n, dim), dtype=jnp.float32)

    ref = _reference(x, epsilon=0.0005)

    # 1) f32-faithful mode: tight parity with the f32 reference.
    out_hi = jax.block_until_ready(
        orthogonal_layer(x, epsilon=0.0005,
                         precision=jax.lax.Precision.HIGHEST))
    assert out_hi.shape == (n, dim)
    err_hi = float(jnp.max(jnp.abs(out_hi - ref)))
    assert jnp.allclose(out_hi, ref, atol=2e-3, rtol=2e-3), (
        f"HIGHEST-precision mismatch vs reference (max abs err {err_hi})")

    # 2) Ragged-tile + 2-way split + overshoot-clamp path (forced small tile).
    out_rg = jax.block_until_ready(
        orthogonal_layer(x, epsilon=0.0005, num_splits=2, tile_rows=24,
                         precision=jax.lax.Precision.HIGHEST))
    err_rg = float(jnp.max(jnp.abs(out_rg - ref)))
    assert jnp.allclose(out_rg, ref, atol=2e-3, rtol=2e-3), (
        f"ragged/split path mismatch vs reference (max abs err {err_rg})")

    # 3) Chip-aware defaults (may use bf16 MXU passes on v7x): loose check.
    out_auto = jax.block_until_ready(orthogonal_layer(x, epsilon=0.0005))
    err_auto = float(jnp.max(jnp.abs(out_auto - ref)))
    assert jnp.allclose(out_auto, ref, atol=5e-2, rtol=5e-2), (
        f"default-precision mismatch vs reference (max abs err {err_auto})")

    print("KERNEL_OK")
</pallas_src>

<mosaic_0001>
module attributes {stable_mosaic.version = 11 : i64} {
  func.func @kernel(%arg0: i32, %arg1: i32, %arg2: memref<1xi32, #tpu.memory_space<smem>>, %arg3: memref<50x128xf32, #tpu.memory_space<vmem>>, %arg4: memref<1x128x128xf32, #tpu.memory_space<vmem>>) attributes {dimension_semantics = [#tpu.dimension_semantics<parallel>, #tpu.dimension_semantics<arbitrary>], iteration_bounds = array<i64: 1, 1>, scalar_prefetch = 1 : i64, scratch_operands = 0 : i64, tpu.core_type = #tpu.core_type<tc>, window_params = [{transform_indices = @transform_0, window_bounds = array<i64: 50, 128>}, {transform_indices = @transform_1, window_bounds = array<i64: 1, 128, 128>}]} {
    %c0_i32 = arith.constant 0 : i32
    %0 = arith.cmpi eq, %arg1, %c0_i32 : i32
    %1 = arith.extui %0 : i1 to i32
    %c0_i32_0 = arith.constant 0 : i32
    %2 = arith.cmpi ne, %1, %c0_i32_0 : i32
    scf.if %2 {
      %cst = arith.constant 0.000000e+00 : f32
      %15 = vector.broadcast %cst : f32 to vector<128x128xf32>
      %c0_5 = arith.constant 0 : index
      %c0_6 = arith.constant 0 : index
      %c0_7 = arith.constant 0 : index
      %16 = vector.load %arg4[%c0_5, %c0_6, %c0_7] : memref<1x128x128xf32, #tpu.memory_space<vmem>>, vector<1x128x128xf32>
      %17 = vector.shape_cast %16 : vector<1x128x128xf32> to vector<128x128xf32>
      %18 = vector.shape_cast %15 : vector<128x128xf32> to vector<1x128x128xf32>
      tpu.vector_store %arg4[%c0_5, %c0_6, %c0_7], %18 {strides = array<i32>} : memref<1x128x128xf32, #tpu.memory_space<vmem>>, vector<1x128x128xf32>,
    } else {
    }
    %c1_i32 = arith.constant 1 : i32
    %3 = arith.muli %arg0, %c1_i32 : i32
    %4 = arith.addi %3, %arg1 : i32
    %c50_i32 = arith.constant 50 : i32
    %5 = arith.muli %4, %c50_i32 : i32
    %c0 = arith.constant 0 : index
    %6 = memref.load %arg2[%c0] : memref<1xi32, #tpu.memory_space<smem>>
    %c50_i32_1 = arith.constant 50 : i32
    %7 = arith.addi %5, %c50_i32_1 : i32
    %8 = arith.cmpi sle, %7, %6 : i32
    %9 = arith.extui %8 : i1 to i32
    %c0_i32_2 = arith.constant 0 : i32
    %10 = arith.cmpi ne, %9, %c0_i32_2 : i32
    scf.if %10 {
      %c0_5 = arith.constant 0 : index
      %c0_6 = arith.constant 0 : index
      %15 = vector.load %arg3[%c0_5, %c0_6] : memref<50x128xf32, #tpu.memory_space<vmem>>, vector<50x128xf32>
      %c0_7 = arith.constant 0 : index
      %c0_8 = arith.constant 0 : index
      %c0_9 = arith.constant 0 : index
      %16 = vector.load %arg4[%c0_7, %c0_8, %c0_9] : memref<1x128x128xf32, #tpu.memory_space<vmem>>, vector<1x128x128xf32>
      %17 = vector.shape_cast %16 : vector<1x128x128xf32> to vector<128x128xf32>
      %cst = arith.constant dense<0.000000e+00> : vector<128x128xf32>
      %18 = tpu.matmul %15, %15, %cst {dimension_numbers = #tpu.dot_dimension_numbers<[0], [0], [1], [1], [0, 1, 1, 1], [], []>, precision = #tpu.contract_precision<fp32>} : vector<50x128xf32>, vector<50x128xf32>, vector<128x128xf32> -> vector<128x128xf32>
      %19 = arith.addf %17, %18 : vector<128x128xf32>
      %c0_10 = arith.constant 0 : index
      %c0_11 = arith.constant 0 : index
      %c0_12 = arith.constant 0 : index
      %20 = vector.load %arg4[%c0_10, %c0_11, %c0_12] : memref<1x128x128xf32, #tpu.memory_space<vmem>>, vector<1x128x128xf32>
      %21 = vector.shape_cast %20 : vector<1x128x128xf32> to vector<128x128xf32>
      %22 = vector.shape_cast %19 : vector<128x128xf32> to vector<1x128x128xf32>
      tpu.vector_store %arg4[%c0_10, %c0_11, %c0_12], %22 {strides = array<i32>} : memref<1x128x128xf32, #tpu.memory_space<vmem>>, vector<1x128x128xf32>,
    } else {
    }
    %c50_i32_3 = arith.constant 50 : i32
    %11 = arith.addi %5, %c50_i32_3 : i32
    %12 = arith.cmpi sgt, %11, %6 : i32
    %13 = arith.extui %12 : i1 to i32
    %c0_i32_4 = arith.constant 0 : i32
    %14 = arith.cmpi ne, %13, %c0_i32_4 : i32
    scf.if %14 {
      %15 = tpu.iota {dimensions = array<i32: 0>} : vector<50x128xi32>
      %16 = vector.broadcast %5 : i32 to vector<50x128xi32>
      %17 = arith.addi %15, %16 : vector<50x128xi32>
      %18 = vector.broadcast %6 : i32 to vector<50x128xi32>
      %19 = arith.cmpi slt, %17, %18 : vector<50x128xi32>
      %c0_5 = arith.constant 0 : index
      %c0_6 = arith.constant 0 : index
      %20 = vector.load %arg3[%c0_5, %c0_6] : memref<50x128xf32, #tpu.memory_space<vmem>>, vector<50x128xf32>
      %cst = arith.constant 0.000000e+00 : f32
      %21 = vector.broadcast %cst : f32 to vector<50x128xf32>
      %22 = arith.select %19, %20, %21 : vector<50x128xi1>, vector<50x128xf32>
      %c0_7 = arith.constant 0 : index
      %c0_8 = arith.constant 0 : index
      %c0_9 = arith.constant 0 : index
      %23 = vector.load %arg4[%c0_7, %c0_8, %c0_9] : memref<1x128x128xf32, #tpu.memory_space<vmem>>, vector<1x128x128xf32>
      %24 = vector.shape_cast %23 : vector<1x128x128xf32> to vector<128x128xf32>
      %cst_10 = arith.constant dense<0.000000e+00> : vector<128x128xf32>
      %25 = tpu.matmul %22, %22, %cst_10 {dimension_numbers = #tpu.dot_dimension_numbers<[0], [0], [1], [1], [0, 1, 1, 1], [], []>, precision = #tpu.contract_precision<fp32>} : vector<50x128xf32>, vector<50x128xf32>, vector<128x128xf32> -> vector<128x128xf32>
      %26 = arith.addf %24, %25 : vector<128x128xf32>
      %c0_11 = arith.constant 0 : index
      %c0_12 = arith.constant 0 : index
      %c0_13 = arith.constant 0 : index
      %27 = vector.load %arg4[%c0_11, %c0_12, %c0_13] : memref<1x128x128xf32, #tpu.memory_space<vmem>>, vector<1x128x128xf32>
      %28 = vector.shape_cast %27 : vector<1x128x128xf32> to vector<128x128xf32>
      %29 = vector.shape_cast %26 : vector<128x128xf32> to vector<1x128x128xf32>
      tpu.vector_store %arg4[%c0_11, %c0_12, %c0_13], %29 {strides = array<i32>} : memref<1x128x128xf32, #tpu.memory_space<vmem>>, vector<1x128x128xf32>,
    } else {
    }
    return
  }
  func.func @transform_0(%arg0: i32, %arg1: i32, %arg2: memref<1xi32, #tpu.memory_space<smem>>) -> (i32, i32) {
    %c1_i32 = arith.constant 1 : i32
    %0 = arith.muli %arg0, %c1_i32 : i32
    %1 = arith.addi %0, %arg1 : i32
    %c0_i32 = arith.constant 0 : i32
    %2 = arith.minsi %1, %c0_i32 : i32
    %c0_i32_0 = arith.constant 0 : i32
    %c0_i32_1 = arith.constant 0 : i32
    return %2, %c0_i32_0 : i32, i32
  }
  func.func @transform_1(%arg0: i32, %arg1: i32, %arg2: memref<1xi32, #tpu.memory_space<smem>>) -> (i32, i32, i32) {
    %c0_i32 = arith.constant 0 : i32
    %c0_i32_0 = arith.constant 0 : i32
    %c0_i32_1 = arith.constant 0 : i32
    return %arg0, %c0_i32, %c0_i32_0 : i32, i32, i32
  }
}

</mosaic_0001>

<llo_original>
// kernel: tpu_custom_call.1
$region0: #{tpu_custom_call.1}
  #allocation0 [shape = 'u32[]', space=smem, size = 0x4, offset = 0x4, fixed_abs, tag = 'smem constant byte address 0x4 - core index']
  #allocation1 [shape = 'u32[144,128]{1,0:T(1,128)}', space=vmem, size = 0x12000, scoped, tag = 'internal scratch']
  #allocation2 [shape = 's32[1]{0}', space=sflag, size = 0x4, scoped, tag = 'scoped memory for tpu_custom_call.1']
  #allocation3 [shape = 's32[1]{0:T(128)S(6)}', space=smem, size = 0x200, scoped, tag = 'prefetched SMEM operand 0']
  %s0 = inlined_call_operand.<no memory space> [shape: s32[1], index: 0, kind: input, shape index: {}]
  %s1 = inlined_call_operand.hbm [shape: f32[50,128], index: 1, kind: input, shape index: {}]
  %s2 = inlined_call_operand.hbm [shape: f32[1,128,128], index: 2, kind: output, shape index: {}]
  %s3 = sld [smem:[#allocation0]]
  $region30: #{tpu_custom_call.1} parent=0
    _
  %s5 = ssub.s32 1, %s3
  %s6 = scalar_select 0, %s5, %s3
  %7 = sst [smem:[#allocation3]] %s0
  $region1: #{tpu_custom_call.1} parent=0
    #allocation4 [shape = 'u8[28672]{0}', space=vmem, size = 0x7000, scoped, tag = 'input window, operand 1, single buffered']
    #allocation5 [shape = 's32[1]{0}', space=sflag, size = 0x4, scoped, tag = 'scoped memory for tpu_custom_call.1']
    #allocation6 [shape = 's32[1]{0}', space=sflag, size = 0x4, scoped, tag = 'scoped memory for tpu_custom_call.1']
    #allocation7 [shape = 'u8[65536]{0}', space=vmem, size = 0x10000, scoped, tag = 'output window, operand 0, single buffered']
    %8 = vsyncpa [#allocation5], 0
    %9 = vsyncpa [#allocation6], 0
    // Predicated region
    $region2: #{tpu_custom_call.1} parent=1 // pred_check
      _
    $region3: #{tpu_custom_call.1} parent=1 // pred_check_branch
      %11 = sbr.rel (0) target = $region5
    $region4: #{tpu_custom_call.1} parent=1 // pred_region
      %s12 = sadd.s32 0, 0
      %p13 = scmp.lt.s32.totalorder %s12, 0
      %s14 = scalar_select %p13, %s12, 0
      %s15 = smul.u32 7, %s14
      %s17 = ssub.s32 896, 896
      %18 = vsyncadd [#allocation5], %s17
      %s19 = smul.addr %s15, 128
      %s20 = scalar_lea.hbm %s1, %s19
      %s21 = sshll.u32 [#allocation4], 4
      %s22 = int_to_ptr.vmem [resolvable:$true] %s21
      %27 = dma.hbm_to_vmem [thread:$0]  %s20, 896, %s22, [#allocation5], 128, 128, 8
    $region5: #{tpu_custom_call.1} parent=1 // pred_fallthru
      _
    // Predicated region
    $region6: #{tpu_custom_call.1} parent=1 // pred_check
      _
    $region7: #{tpu_custom_call.1} parent=1 // pred_check_branch
      %29 = sbr.rel (0) target = $region9
    $region8: #{tpu_custom_call.1} parent=1 // pred_region
      %30 = dma.done [#allocation5], 896
    $region9: #{tpu_custom_call.1} parent=1 // pred_fallthru
      _
    %s31 = sadd.s32 0, 0
    %p32 = scmp.lt.s32.totalorder %s31, 0
    %s33 = scalar_select %p32, %s31, 0
    %s34 = smul.u32 7, %s33
    %p35 = scmp.eq.s32.totalorder 0, 0
    // Predicated region
    $region10: #{tpu_custom_call.1} parent=1 // pred_check
      %p36 = pneg %p35
    $region11: #{tpu_custom_call.1} parent=1 // pred_check_branch
      %38 = sbr.rel (%p36) target = $region13
    $region12: #{tpu_custom_call.1} parent=1 // pred_region
      %39 = vst [vmem:[#allocation7] sm:$0xff] 0.0
      %40 = vst [vmem:[#allocation7 + $0x8] sm:$0xff] 0.0
      %41 = vst [vmem:[#allocation7 + $0x10] sm:$0xff] 0.0
      %42 = vst [vmem:[#allocation7 + $0x18] sm:$0xff] 0.0
      %43 = vst [vmem:[#allocation7 + $0x20] sm:$0xff] 0.0
      %44 = vst [vmem:[#allocation7 + $0x28] sm:$0xff] 0.0
      %45 = vst [vmem:[#allocation7 + $0x30] sm:$0xff] 0.0
      %46 = vst [vmem:[#allocation7 + $0x38] sm:$0xff] 0.0
      %47 = vst [vmem:[#allocation7 + $0x40] sm:$0xff] 0.0
      %48 = vst [vmem:[#allocation7 + $0x48] sm:$0xff] 0.0
      %49 = vst [vmem:[#allocation7 + $0x50] sm:$0xff] 0.0
      %50 = vst [vmem:[#allocation7 + $0x58] sm:$0xff] 0.0
      %51 = vst [vmem:[#allocation7 + $0x60] sm:$0xff] 0.0
      %52 = vst [vmem:[#allocation7 + $0x68] sm:$0xff] 0.0
      %53 = vst [vmem:[#allocation7 + $0x70] sm:$0xff] 0.0
      %54 = vst [vmem:[#allocation7 + $0x78] sm:$0xff] 0.0
    $region13: #{tpu_custom_call.1} parent=1 // pred_fallthru
      _
    %s55 = sadd.s32 0, 0
    %s56 = smul.u32 %s55, 50
    %s57 = sld [smem:[#allocation3]]
    %s58 = sadd.s32 %s56, 50
    %p59 = scmp.le.s32.totalorder %s58, %s57
    // Predicated region
    $region14: #{tpu_custom_call.1} parent=1 // pred_check
      %p60 = pneg %p59
    $region15: #{tpu_custom_call.1} parent=1 // pred_check_branch
      %62 = sbr.rel (%p60) target = $region17
    $region16: #{tpu_custom_call.1} parent=1 // pred_region
      %v63 = vld [vmem:[#allocation4] sm:$0xff]
      %v64 = vld [vmem:[#allocation4 + $0x8] sm:$0xff]
      %v65 = vld [vmem:[#allocation4 + $0x10] sm:$0xff]
      %v66 = vld [vmem:[#allocation4 + $0x18] sm:$0xff]
      %v67 = vld [vmem:[#allocation4 + $0x20] sm:$0xff]
      %v68 = vld [vmem:[#allocation4 + $0x28] sm:$0xff]
      %v69 = vld [vmem:[#allocation4 + $0x30] sm:$0x3]
      %v70 = vld [vmem:[#allocation7] sm:$0xff]
      %v71 = vld [vmem:[#allocation7 + $0x8] sm:$0xff]
      %v72 = vld [vmem:[#allocation7 + $0x10] sm:$0xff]
      %v73 = vld [vmem:[#allocation7 + $0x18] sm:$0xff]
      %v74 = vld [vmem:[#allocation7 + $0x20] sm:$0xff]
      %v75 = vld [vmem:[#allocation7 + $0x28] sm:$0xff]
      %v76 = vld [vmem:[#allocation7 + $0x30] sm:$0xff]
      %v77 = vld [vmem:[#allocation7 + $0x38] sm:$0xff]
      %v78 = vld [vmem:[#allocation7 + $0x40] sm:$0xff]
      %v79 = vld [vmem:[#allocation7 + $0x48] sm:$0xff]
      %v80 = vld [vmem:[#allocation7 + $0x50] sm:$0xff]
      %v81 = vld [vmem:[#allocation7 + $0x58] sm:$0xff]
      %v82 = vld [vmem:[#allocation7 + $0x60] sm:$0xff]
      %v83 = vld [vmem:[#allocation7 + $0x68] sm:$0xff]
      %v84 = vld [vmem:[#allocation7 + $0x70] sm:$0xff]
      %v85 = vld [vmem:[#allocation7 + $0x78] sm:$0xff]
      %86 = vxpose.xlu0.b32.start [1/16] %v63, 128
      %87 = vxpose.xlu0.b32.cont [2/16] %v64, 128
      %88 = vxpose.xlu0.b32.cont [3/16] %v65, 128
      %89 = vxpose.xlu0.b32.cont [4/16] %v66, 128
      %90 = vxpose.xlu0.b32.cont [5/16] %v67, 128
      %91 = vxpose.xlu0.b32.cont [6/16] %v68, 128
      %92 = vxpose.xlu0.b32.cont [7/16] %v69, 128
      %93 = vxpose.xlu0.b32.cont [8/16] 0.0, 128
      %94 = vxpose.xlu0.b32.cont [9/16] 0.0, 128
      %95 = vxpose.xlu0.b32.cont [10/16] 0.0, 128
      %96 = vxpose.xlu0.b32.cont [11/16] 0.0, 128
      %97 = vxpose.xlu0.b32.cont [12/16] 0.0, 128
      %98 = vxpose.xlu0.b32.cont [13/16] 0.0, 128
      %99 = vxpose.xlu0.b32.cont [14/16] 0.0, 128
      %100 = vxpose.xlu0.b32.cont [15/16] 0.0, 128
      %101 = vxpose.xlu0.b32.end [16/16] 0.0, 128
      %v102 = vpop.trf.xlu0
      %v103 = vpop.trf.xlu0
      %v104 = vpop.trf.xlu0
      %v105 = vpop.trf.xlu0
      %v106 = vpop.trf.xlu0
      %v107 = vpop.trf.xlu0
      %v108 = vpop.trf.xlu0
      %v109 = vpop.trf.xlu0
      %v110 = vpop.trf.xlu0
      %v111 = vpop.trf.xlu0
      %v112 = vpop.trf.xlu0
      %v113 = vpop.trf.xlu0
      %v114 = vpop.trf.xlu0
      %v115 = vpop.trf.xlu0
      %v116 = vpop.trf.xlu0
      %v117 = vpop.trf.xlu0
      %vm118 = vcmask 408576
      %v120 = vsel %vm118, %v102, 0
      %v123 = vsel %vm118, %v103, 0
      %v126 = vsel %vm118, %v104, 0
      %v129 = vsel %vm118, %v105, 0
      %v132 = vsel %vm118, %v106, 0
      %v135 = vsel %vm118, %v107, 0
      %v138 = vsel %vm118, %v108, 0
      %v141 = vsel %vm118, %v109, 0
      %v144 = vsel %vm118, %v110, 0
      %v147 = vsel %vm118, %v111, 0
      %v150 = vsel %vm118, %v112, 0
      %v153 = vsel %vm118, %v113, 0
      %v156 = vsel %vm118, %v114, 0
      %v159 = vsel %vm118, %v115, 0
      %v162 = vsel %vm118, %v116, 0
      %v165 = vsel %vm118, %v117, 0
      %vm167 = vcmask 1041408
      %v169 = vsel %vm167, %v69, 0
      %171 = vmatprep.subr.mxu0 0.0
      %v172 = vand.u32 %v63, 4294901760
      %173 = vmatpush1.msra.mxu0 %v172
      %174 = vmatprep.subr.mxu0 0.0
      %v175 = vand.u32 %v64, 4294901760
      %176 = vmatpush1.msra.mxu0 %v175
      %177 = vmatprep.subr.mxu0 0.0
      %v178 = vand.u32 %v65, 4294901760
      %179 = vmatpush1.msra.mxu0 %v178
      %180 = vmatprep.subr.mxu0 0.0
      %v181 = vand.u32 %v66, 4294901760
      %182 = vmatpush1.msra.mxu0 %v181
      %183 = vmatprep.subr.mxu0 0.0
      %v184 = vand.u32 %v67, 4294901760
      %185 = vmatpush1.msra.mxu0 %v184
      %186 = vmatprep.subr.mxu0 0.0
      %v187 = vand.u32 %v68, 4294901760
      %188 = vmatpush1.msra.mxu0 %v187
      %189 = vmatprep.subr.mxu0 0.0
      %v190 = vand.u32 %v169, 4294901760
      %191 = vmatpush1.msra.mxu0 %v190
      %192 = vmatprep.subr.mxu0 0.0
      %193 = vmatpush1.msra.mxu0 0.0
      %194 = vmatprep.subr.mxu0 0.0
      %195 = vmatpush1.msra.mxu0 0.0
      %196 = vmatprep.subr.mxu0 0.0
      %197 = vmatpush1.msra.mxu0 0.0
      %198 = vmatprep.subr.mxu0 0.0
      %199 = vmatpush1.msra.mxu0 0.0
      %200 = vmatprep.subr.mxu0 0.0
      %201 = vmatpush1.msra.mxu0 0.0
      %202 = vmatprep.subr.mxu0 0.0
      %203 = vmatpush1.msra.mxu0 0.0
      %204 = vmatprep.subr.mxu0 0.0
      %205 = vmatpush1.msra.mxu0 0.0
      %206 = vmatprep.subr.mxu0 0.0
      %207 = vmatpush1.msra.mxu0 0.0
      %208 = vmatprep.subr.mxu0 0.0
      %209 = vmatpush1.msra.mxu0 0.0
      %210 = vmatprep.subr.mxu0 0.0
      %211 = vmatpush1.msra.mxu0 0.0
      %212 = vmatprep.subr.mxu0 0.0
      %213 = vmatpush1.msra.mxu0 0.0
      %214 = vmatprep.subr.mxu0 0.0
      %215 = vmatpush1.msra.mxu0 0.0
      %216 = vmatprep.subr.mxu0 0.0
      %217 = vmatpush1.msra.mxu0 0.0
      %218 = vmatprep.subr.mxu0 0.0
      %219 = vmatpush1.msra.mxu0 0.0
      %220 = vmatprep.subr.mxu0 0.0
      %221 = vmatpush1.msra.mxu0 0.0
      %222 = vmatprep.subr.mxu0 0.0
      %223 = vmatpush1.msra.mxu0 0.0
      %224 = vmatprep.subr.mxu0 0.0
      %225 = vmatpush1.msra.mxu0 0.0
      %226 = vmatprep.subr.mxu0 0.0
      %227 = vmatpush1.msra.mxu0 0.0
      %228 = vmatprep.subr.mxu0 0.0
      %229 = vmatpush1.msra.mxu0 0.0
      %230 = vmatprep.subr.mxu0 0.0
      %231 = vmatpush1.msra.mxu0 0.0
      %232 = vmatprep.subr.mxu0 0.0
      %233 = vmatpush1.msra.mxu0 0.0
      %234 = vmatprep.subr.mxu0 0.0
      %235 = vmatpush1.msra.mxu0 0.0
      %236 = vmatprep.subr.mxu0 0.0
      %237 = vmatpush1.msra.mxu0 0.0
      %238 = vmatprep.subr.mxu0 0.0
      %239 = vmatpush1.msra.mxu0 0.0
      %240 = vmatprep.subr.mxu0 0.0
      %241 = vmatpush1.msra.mxu0 0.0
      %242 = vmatprep.mubr.f32.mxu0 0.0
      %v243 = vand.u32 %v120, 4294901760
      %v244 = vsub.f32 %v120, %v243
      %v245 = vand.u32 %v244, 4294901760
      %v246 = vsub.f32 %v244, %v245
      %v247 = vand.u32 %v246, 4294901760
      %248 = vmatmul.mubr.f32.gmra.mrb[0].mxu0 %v247
      %v249 = vpop.f32.mrb[0].mxu0
      %v250 = vadd.f32 0.0, %v249
      %v251 = vpop.f32.mrb[0].mxu0
      %252 = vmatprep.mubr.f32.mxu0 0.0
      %v253 = vand.u32 %v123, 4294901760
      %v254 = vsub.f32 %v123, %v253
      %v255 = vand.u32 %v254, 4294901760
      %v256 = vsub.f32 %v254, %v255
      %v257 = vand.u32 %v256, 4294901760
      %258 = vmatmul.mubr.f32.gmra.mrb[0].mxu0 %v257
      %v259 = vpop.f32.mrb[0].mxu0
      %v260 = vadd.f32 0.0, %v259
      %v261 = vpop.f32.mrb[0].mxu0
      %262 = vmatprep.mubr.f32.mxu0 0.0
      %v263 = vand.u32 %v126, 4294901760
      %v264 = vsub.f32 %v126, %v263
      %v265 = vand.u32 %v264, 4294901760
      %v266 = vsub.f32 %v264, %v265
      %v267 = vand.u32 %v266, 4294901760
      %268 = vmatmul.mubr.f32.gmra.mrb[0].mxu0 %v267
      %v269 = vpop.f32.mrb[0].mxu0
      %v270 = vadd.f32 0.0, %v269
      %v271 = vpop.f32.mrb[0].mxu0
      %272 = vmatprep.mubr.f32.mxu0 0.0
      %v273 = vand.u32 %v129, 4294901760
      %v274 = vsub.f32 %v129, %v273
      %v275 = vand.u32 %v274, 4294901760
      %v276 = vsub.f32 %v274, %v275
      %v277 = vand.u32 %v276, 4294901760
      %278 = vmatmul.mubr.f32.gmra.mrb[0].mxu0 %v277
      %v279 = vpop.f32.mrb[0].mxu0
      %v280 = vadd.f32 0.0, %v279
      %v281 = vpop.f32.mrb[0].mxu0
      %282 = vmatprep.mubr.f32.mxu0 0.0
      %v283 = vand.u32 %v132, 4294901760
      %v284 = vsub.f32 %v132, %v283
      %v285 = vand.u32 %v284, 4294901760
      %v286 = vsub.f32 %v284, %v285
      %v287 = vand.u32 %v286, 4294901760
      %288 = vmatmul.mubr.f32.gmra.mrb[0].mxu0 %v287
      %v289 = vpop.f32.mrb[0].mxu0
      %v290 = vadd.f32 0.0, %v289
      %v291 = vpop.f32.mrb[0].mxu0
      %292 = vmatprep.mubr.f32.mxu0 0.0
      %v293 = vand.u32 %v135, 4294901760
      %v294 = vsub.f32 %v135, %v293
      %v295 = vand.u32 %v294, 4294901760
      %v296 = vsub.f32 %v294, %v295
      %v297 = vand.u32 %v296, 4294901760
      %298 = vmatmul.mubr.f32.gmra.mrb[0].mxu0 %v297
      %v299 = vpop.f32.mrb[0].mxu0
      %v300 = vadd.f32 0.0, %v299
      %v301 = vpop.f32.mrb[0].mxu0
      %302 = vmatprep.mubr.f32.mxu0 0.0
      %v303 = vand.u32 %v138, 4294901760
      %v304 = vsub.f32 %v138, %v303
      %v305 = vand.u32 %v304, 4294901760
      %v306 = vsub.f32 %v304, %v305
      %v307 = vand.u32 %v306, 4294901760
      %308 = vmatmul.mubr.f32.gmra.mrb[0].mxu0 %v307
      %v309 = vpop.f32.mrb[0].mxu0
      %v310 = vadd.f32 0.0, %v309
      %v311 = vpop.f32.mrb[0].mxu0
      %312 = vmatprep.mubr.f32.mxu0 0.0
      %v313 = vand.u32 %v141, 4294901760
      %v314 = vsub.f32 %v141, %v313
      %v315 = vand.u32 %v314, 4294901760
      %v316 = vsub.f32 %v314, %v315
      %v317 = vand.u32 %v316, 4294901760
      %318 = vmatmul.mubr.f32.gmra.mrb[0].mxu0 %v317
      %v319 = vpop.f32.mrb[0].mxu0
      %v320 = vadd.f32 0.0, %v319
      %v321 = vpop.f32.mrb[0].mxu0
      %322 = vmatprep.mubr.f32.mxu0 0.0
      %v323 = vand.u32 %v144, 4294901760
      %v324 = vsub.f32 %v144, %v323
      %v325 = vand.u32 %v324, 4294901760
      %v326 = vsub.f32 %v324, %v325
      %v327 = vand.u32 %v326, 4294901760
      %328 = vmatmul.mubr.f32.gmra.mrb[0].mxu0 %v327
      %v329 = vpop.f32.mrb[0].mxu0
      %v330 = vadd.f32 0.0, %v329
      %v331 = vpop.f32.mrb[0].mxu0
      %332 = vmatprep.mubr.f32.mxu0 0.0
      %v333 = vand.u32 %v147, 4294901760
      %v334 = vsub.f32 %v147, %v333
      %v335 = vand.u32 %v334, 4294901760
      %v336 = vsub.f32 %v334, %v335
      %v337 = vand.u32 %v336, 4294901760
      %338 = vmatmul.mubr.f32.gmra.mrb[0].mxu0 %v337
      %v339 = vpop.f32.mrb[0].mxu0
      %v340 = vadd.f32 0.0, %v339
      %v341 = vpop.f32.mrb[0].mxu0
      %342 = vmatprep.mubr.f32.mxu0 0.0
      %v343 = vand.u32 %v150, 4294901760
      %v344 = vsub.f32 %v150, %v343
      %v345 = vand.u32 %v344, 4294901760
      %v346 = vsub.f32 %v344, %v345
      %v347 = vand.u32 %v346, 4294901760
      %348 = vmatmul.mubr.f32.gmra.mrb[0].mxu0 %v347
      %v349 = vpop.f32.mrb[0].mxu0
      %v350 = vadd.f32 0.0, %v349
      %v351 = vpop.f32.mrb[0].mxu0
      %352 = vmatprep.mubr.f32.mxu0 0.0
      %v353 = vand.u32 %v153, 4294901760
      %v354 = vsub.f32 %v153, %v353
      %v355 = vand.u32 %v354, 4294901760
      %v356 = vsub.f32 %v354, %v355
      %v357 = vand.u32 %v356, 4294901760
      %358 = vmatmul.mubr.f32.gmra.mrb[0].mxu0 %v357
      %v359 = vpop.f32.mrb[0].mxu0
      %v360 = vadd.f32 0.0, %v359
      %v361 = vpop.f32.mrb[0].mxu0
      %362 = vmatprep.mubr.f32.mxu0 0.0
      %v363 = vand.u32 %v156, 4294901760
      %v364 = vsub.f32 %v156, %v363
      %v365 = vand.u32 %v364, 4294901760
      %v366 = vsub.f32 %v364, %v365
      %v367 = vand.u32 %v366, 4294901760
      %368 = vmatmul.mubr.f32.gmra.mrb[0].mxu0 %v367
      %v369 = vpop.f32.mrb[0].mxu0
      %v370 = vadd.f32 0.0, %v369
      %v371 = vpop.f32.mrb[0].mxu0
      %372 = vmatprep.mubr.f32.mxu0 0.0
      %v373 = vand.u32 %v159, 4294901760
      %v374 = vsub.f32 %v159, %v373
      %v375 = vand.u32 %v374, 4294901760
      %v376 = vsub.f32 %v374, %v375
      %v377 = vand.u32 %v376, 4294901760
      %378 = vmatmul.mubr.f32.gmra.mrb[0].mxu0 %v377
      %v379 = vpop.f32.mrb[0].mxu0
      %v380 = vadd.f32 0.0, %v379
      %v381 = vpop.f32.mrb[0].mxu0
      %382 = vmatprep.mubr.f32.mxu0 0.0
      %v383 = vand.u32 %v162, 4294901760
      %v384 = vsub.f32 %v162, %v383
      %v385 = vand.u32 %v384, 4294901760
      %v386 = vsub.f32 %v384, %v385
      %v387 = vand.u32 %v386, 4294901760
      %388 = vmatmul.mubr.f32.gmra.mrb[0].mxu0 %v387
      %v389 = vpop.f32.mrb[0].mxu0
      %v390 = vadd.f32 0.0, %v389
      %v391 = vpop.f32.mrb[0].mxu0
      %392 = vmatprep.mubr.f32.mxu0 0.0
      %v393 = vand.u32 %v165, 4294901760
      %v394 = vsub.f32 %v165, %v393
      %v395 = vand.u32 %v394, 4294901760
      %v396 = vsub.f32 %v394, %v395
      %v397 = vand.u32 %v396, 4294901760
      %398 = vmatmul.mubr.f32.gmra.mrb[0].mxu0 %v397
      %v399 = vpop.f32.mrb[0].mxu0
      %v400 = vadd.f32 0.0, %v399
      %v401 = vpop.f32.mrb[0].mxu0
      %402 = vdwg.mxu0
      %403 = vmatprep.subr.mxu0 0.0
      %v404 = vand.u32 %v63, 4294901760
      %v405 = vsub.f32 %v63, %v404
      %v406 = vand.u32 %v405, 4294901760
      %v407 = vsub.f32 %v405, %v406
      %v408 = vand.u32 %v407, 4294901760
      %409 = vmatpush1.msra.mxu0 %v408
      %410 = vmatprep.subr.mxu0 0.0
      %v411 = vand.u32 %v64, 4294901760
      %v412 = vsub.f32 %v64, %v411
      %v413 = vand.u32 %v412, 4294901760
      %v414 = vsub.f32 %v412, %v413
      %v415 = vand.u32 %v414, 4294901760
      %416 = vmatpush1.msra.mxu0 %v415
      %417 = vmatprep.subr.mxu0 0.0
      %v418 = vand.u32 %v65, 4294901760
      %v419 = vsub.f32 %v65, %v418
      %v420 = vand.u32 %v419, 4294901760
      %v421 = vsub.f32 %v419, %v420
      %v422 = vand.u32 %v421, 4294901760
      %423 = vmatpush1.msra.mxu0 %v422
      %424 = vmatprep.subr.mxu0 0.0
      %v425 = vand.u32 %v66, 4294901760
      %v426 = vsub.f32 %v66, %v425
      %v427 = vand.u32 %v426, 4294901760
      %v428 = vsub.f32 %v426, %v427
      %v429 = vand.u32 %v428, 4294901760
      %430 = vmatpush1.msra.mxu0 %v429
      %431 = vmatprep.subr.mxu0 0.0
      %v432 = vand.u32 %v67, 4294901760
      %v433 = vsub.f32 %v67, %v432
      %v434 = vand.u32 %v433, 4294901760
      %v435 = vsub.f32 %v433, %v434
      %v436 = vand.u32 %v435, 4294901760
      %437 = vmatpush1.msra.mxu0 %v436
      %438 = vmatprep.subr.mxu0 0.0
      %v439 = vand.u32 %v68, 4294901760
      %v440 = vsub.f32 %v68, %v439
      %v441 = vand.u32 %v440, 4294901760
      %v442 = vsub.f32 %v440, %v441
      %v443 = vand.u32 %v442, 4294901760
      %444 = vmatpush1.msra.mxu0 %v443
      %445 = vmatprep.subr.mxu0 0.0
      %v446 = vand.u32 %v169, 4294901760
      %v447 = vsub.f32 %v169, %v446
      %v448 = vand.u32 %v447, 4294901760
      %v449 = vsub.f32 %v447, %v448
      %v450 = vand.u32 %v449, 4294901760
      %451 = vmatpush1.msra.mxu0 %v450
      %452 = vmatprep.subr.mxu0 0.0
      %453 = vmatpush1.msra.mxu0 0.0
      %454 = vmatprep.subr.mxu0 0.0
      %455 = vmatpush1.msra.mxu0 0.0
      %456 = vmatprep.subr.mxu0 0.0
      %457 = vmatpush1.msra.mxu0 0.0
      %458 = vmatprep.subr.mxu0 0.0
      %459 = vmatpush1.msra.mxu0 0.0
      %460 = vmatprep.subr.mxu0 0.0
      %461 = vmatpush1.msra.mxu0 0.0
      %462 = vmatprep.subr.mxu0 0.0
      %463 = vmatpush1.msra.mxu0 0.0
      %464 = vmatprep.subr.mxu0 0.0
      %465 = vmatpush1.msra.mxu0 0.0
      %466 = vmatprep.subr.mxu0 0.0
      %467 = vmatpush1.msra.mxu0 0.0
      %468 = vmatprep.subr.mxu0 0.0
      %469 = vmatpush1.msra.mxu0 0.0
      %470 = vmatprep.subr.mxu0 0.0
      %471 = vmatpush1.msra.mxu0 0.0
      %472 = vmatprep.subr.mxu0 0.0
      %473 = vmatpush1.msra.mxu0 0.0
      %474 = vmatprep.subr.mxu0 0.0
      %475 = vmatpush1.msra.mxu0 0.0
      %476 = vmatprep.subr.mxu0 0.0
      %477 = vmatpush1.msra.mxu0 0.0
      %478 = vmatprep.subr.mxu0 0.0
      %479 = vmatpush1.msra.mxu0 0.0
      %480 = vmatprep.subr.mxu0 0.0
      %481 = vmatpush1.msra.mxu0 0.0
      %482 = vmatprep.subr.mxu0 0.0
      %483 = vmatpush1.msra.mxu0 0.0
      %484 = vmatprep.subr.mxu0 0.0
      %485 = vmatpush1.msra.mxu0 0.0
      %486 = vmatprep.subr.mxu0 0.0
      %487 = vmatpush1.msra.mxu0 0.0
      %488 = vmatprep.subr.mxu0 0.0
      %489 = vmatpush1.msra.mxu0 0.0
      %490 = vmatprep.subr.mxu0 0.0
      %491 = vmatpush1.msra.mxu0 0.0
      %492 = vmatprep.subr.mxu0 0.0
      %493 = vmatpush1.msra.mxu0 0.0
      %494 = vmatprep.subr.mxu0 0.0
      %495 = vmatpush1.msra.mxu0 0.0
      %496 = vmatprep.subr.mxu0 0.0
      %497 = vmatpush1.msra.mxu0 0.0
      %498 = vmatprep.subr.mxu0 0.0
      %499 = vmatpush1.msra.mxu0 0.0
      %500 = vmatprep.subr.mxu0 0.0
      %501 = vmatpush1.msra.mxu0 0.0
      %502 = vmatprep.mubr.f32.mxu0 0.0
      %v503 = vand.u32 %v120, 4294901760
      %504 = vmatmul.mubr.f32.gmra.mrb[0].mxu0 %v503
      %v505 = vpop.f32.mrb[0].mxu0
      %v506 = vadd.f32 %v250, %v505
      %v507 = vpop.f32.mrb[0].mxu0
      %508 = vmatprep.mubr.f32.mxu0 0.0
      %v509 = vand.u32 %v123, 4294901760
      %510 = vmatmul.mubr.f32.gmra.mrb[0].mxu0 %v509
      %v511 = vpop.f32.mrb[0].mxu0
      %v512 = vadd.f32 %v260, %v511
      %v513 = vpop.f32.mrb[0].mxu0
      %514 = vmatprep.mubr.f32.mxu0 0.0
      %v515 = vand.u32 %v126, 4294901760
      %516 = vmatmul.mubr.f32.gmra.mrb[0].mxu0 %v515
      %v517 = vpop.f32.mrb[0].mxu0
      %v518 = vadd.f32 %v270, %v517
      %v519 = vpop.f32.mrb[0].mxu0
      %520 = vmatprep.mubr.f32.mxu0 0.0
      %v521 = vand.u32 %v129, 4294901760
      %522 = vmatmul.mubr.f32.gmra.mrb[0].mxu0 %v521
      %v523 = vpop.f32.mrb[0].mxu0
      %v524 = vadd.f32 %v280, %v523
      %v525 = vpop.f32.mrb[0].mxu0
      %526 = vmatprep.mubr.f32.mxu0 0.0
      %v527 = vand.u32 %v132, 4294901760
      %528 = vmatmul.mubr.f32.gmra.mrb[0].mxu0 %v527
      %v529 = vpop.f32.mrb[0].mxu0
      %v530 = vadd.f32 %v290, %v529
      %v531 = vpop.f32.mrb[0].mxu0
      %532 = vmatprep.mubr.f32.mxu0 0.0
      %v533 = vand.u32 %v135, 4294901760
      %534 = vmatmul.mubr.f32.gmra.mrb[0].mxu0 %v533
      %v535 = vpop.f32.mrb[0].mxu0
      %v536 = vadd.f32 %v300, %v535
      %v537 = vpop.f32.mrb[0].mxu0
      %538 = vmatprep.mubr.f32.mxu0 0.0
      %v539 = vand.u32 %v138, 4294901760
      %540 = vmatmul.mubr.f32.gmra.mrb[0].mxu0 %v539
      %v541 = vpop.f32.mrb[0].mxu0
      %v542 = vadd.f32 %v310, %v541
      %v543 = vpop.f32.mrb[0].mxu0
      %544 = vmatprep.mubr.f32.mxu0 0.0
      %v545 = vand.u32 %v141, 4294901760
      %546 = vmatmul.mubr.f32.gmra.mrb[0].mxu0 %v545
      %v547 = vpop.f32.mrb[0].mxu0
      %v548 = vadd.f32 %v320, %v547
      %v549 = vpop.f32.mrb[0].mxu0
      %550 = vmatprep.mubr.f32.mxu0 0.0
      %v551 = vand.u32 %v144, 4294901760
      %552 = vmatmul.mubr.f32.gmra.mrb[0].mxu0 %v551
      %v553 = vpop.f32.mrb[0].mxu0
      %v554 = vadd.f32 %v330, %v553
      %v555 = vpop.f32.mrb[0].mxu0
      %556 = vmatprep.mubr.f32.mxu0 0.0
      %v557 = vand.u32 %v147, 4294901760
      %558 = vmatmul.mubr.f32.gmra.mrb[0].mxu0 %v557
      %v559 = vpop.f32.mrb[0].mxu0
      %v560 = vadd.f32 %v340, %v559
      %v561 = vpop.f32.mrb[0].mxu0
      %562 = vmatprep.mubr.f32.mxu0 0.0
      %v563 = vand.u32 %v150, 4294901760
      %564 = vmatmul.mubr.f32.gmra.mrb[0].mxu0 %v563
      %v565 = vpop.f32.mrb[0].mxu0
      %v566 = vadd.f32 %v350, %v565
      %v567 = vpop.f32.mrb[0].mxu0
      %568 = vmatprep.mubr.f32.mxu0 0.0
      %v569 = vand.u32 %v153, 4294901760
      %570 = vmatmul.mubr.f32.gmra.mrb[0].mxu0 %v569
      %v571 = vpop.f32.mrb[0].mxu0
      %v572 = vadd.f32 %v360, %v571
      %v573 = vpop.f32.mrb[0].mxu0
      %574 = vmatprep.mubr.f32.mxu0 0.0
      %v575 = vand.u32 %v156, 4294901760
      %576 = vmatmul.mubr.f32.gmra.mrb[0].mxu0 %v575
      %v577 = vpop.f32.mrb[0].mxu0
      %v578 = vadd.f32 %v370, %v577
      %v579 = vpop.f32.mrb[0].mxu0
      %580 = vmatprep.mubr.f32.mxu0 0.0
      %v581 = vand.u32 %v159, 4294901760
      %582 = vmatmul.mubr.f32.gmra.mrb[0].mxu0 %v581
      %v583 = vpop.f32.mrb[0].mxu0
      %v584 = vadd.f32 %v380, %v583
      %v585 = vpop.f32.mrb[0].mxu0
      %586 = vmatprep.mubr.f32.mxu0 0.0
      %v587 = vand.u32 %v162, 4294901760
      %588 = vmatmul.mubr.f32.gmra.mrb[0].mxu0 %v587
      %v589 = vpop.f32.mrb[0].mxu0
      %v590 = vadd.f32 %v390, %v589
      %v591 = vpop.f32.mrb[0].mxu0
      %592 = vmatprep.mubr.f32.mxu0 0.0
      %v593 = vand.u32 %v165, 4294901760
      %594 = vmatmul.mubr.f32.gmra.mrb[0].mxu0 %v593
      %v595 = vpop.f32.mrb[0].mxu0
      %v596 = vadd.f32 %v400, %v595
      %v597 = vpop.f32.mrb[0].mxu0
      %598 = vdwg.mxu0
      %599 = vmatprep.subr.mxu0 0.0
      %v600 = vand.u32 %v63, 4294901760
      %v601 = vsub.f32 %v63, %v600
      %602 = vmatpush1.msra.mxu0 %v601
      %603 = vmatprep.subr.mxu0 0.0
      %v604 = vand.u32 %v64, 4294901760
      %v605 = vsub.f32 %v64, %v604
      %606 = vmatpush1.msra.mxu0 %v605
      %607 = vmatprep.subr.mxu0 0.0
      %v608 = vand.u32 %v65, 4294901760
      %v609 = vsub.f32 %v65, %v608
      %610 = vmatpush1.msra.mxu0 %v609
      %611 = vmatprep.subr.mxu0 0.0
      %v612 = vand.u32 %v66, 4294901760
      %v613 = vsub.f32 %v66, %v612
      %614 = vmatpush1.msra.mxu0 %v613
      %615 = vmatprep.subr.mxu0 0.0
      %v616 = vand.u32 %v67, 4294901760
      %v617 = vsub.f32 %v67, %v616
      %618 = vmatpush1.msra.mxu0 %v617
      %619 = vmatprep.subr.mxu0 0.0
      %v620 = vand.u32 %v68, 4294901760
      %v621 = vsub.f32 %v68, %v620
      %622 = vmatpush1.msra.mxu0 %v621
      %623 = vmatprep.subr.mxu0 0.0
      %v624 = vand.u32 %v169, 4294901760
      %v625 = vsub.f32 %v169, %v624
      %626 = vmatpush1.msra.mxu0 %v625
      %627 = vmatprep.subr.mxu0 0.0
      %628 = vmatpush1.msra.mxu0 0.0
      %629 = vmatprep.subr.mxu0 0.0
      %630 = vmatpush1.msra.mxu0 0.0
      %631 = vmatprep.subr.mxu0 0.0
      %632 = vmatpush1.msra.mxu0 0.0
      %633 = vmatprep.subr.mxu0 0.0
      %634 = vmatpush1.msra.mxu0 0.0
      %635 = vmatprep.subr.mxu0 0.0
      %636 = vmatpush1.msra.mxu0 0.0
      %637 = vmatprep.subr.mxu0 0.0
      %638 = vmatpush1.msra.mxu0 0.0
      %639 = vmatprep.subr.mxu0 0.0
      %640 = vmatpush1.msra.mxu0 0.0
      %641 = vmatprep.subr.mxu0 0.0
      %642 = vmatpush1.msra.mxu0 0.0
      %643 = vmatprep.subr.mxu0 0.0
      %644 = vmatpush1.msra.mxu0 0.0
      %645 = vmatprep.subr.mxu0 0.0
      %646 = vmatpush1.msra.mxu0 0.0
      %647 = vmatprep.subr.mxu0 0.0
      %648 = vmatpush1.msra.mxu0 0.0
      %649 = vmatprep.subr.mxu0 0.0
      %650 = vmatpush1.msra.mxu0 0.0
      %651 = vmatprep.subr.mxu0 0.0
      %652 = vmatpush1.msra.mxu0 0.0
      %653 = vmatprep.subr.mxu0 0.0
      %654 = vmatpush1.msra.mxu0 0.0
      %655 = vmatprep.subr.mxu0 0.0
      %656 = vmatpush1.msra.mxu0 0.0
      %657 = vmatprep.subr.mxu0 0.0
      %658 = vmatpush1.msra.mxu0 0.0
      %659 = vmatprep.subr.mxu0 0.0
      %660 = vmatpush1.msra.mxu0 0.0
      %661 = vmatprep.subr.mxu0 0.0
      %662 = vmatpush1.msra.mxu0 0.0
      %663 = vmatprep.subr.mxu0 0.0
      %664 = vmatpush1.msra.mxu0 0.0
      %665 = vmatprep.subr.mxu0 0.0
      %666 = vmatpush1.msra.mxu0 0.0
      %667 = vmatprep.subr.mxu0 0.0
      %668 = vmatpush1.msra.mxu0 0.0
      %669 = vmatprep.subr.mxu0 0.0
      %670 = vmatpush1.msra.mxu0 0.0
      %671 = vmatprep.subr.mxu0 0.0
      %672 = vmatpush1.msra.mxu0 0.0
      %673 = vmatprep.subr.mxu0 0.0
      %674 = vmatpush1.msra.mxu0 0.0
      %675 = vmatprep.subr.mxu0 0.0
      %676 = vmatpush1.msra.mxu0 0.0
      %677 = vmatprep.mubr.f32.mxu0 0.0
      %v678 = vand.u32 %v120, 4294901760
      %v679 = vsub.f32 %v120, %v678
      %680 = vmatmul.mubr.f32.gmra.mrb[0].mxu0 %v679
      %v681 = vpop.f32.mrb[0].mxu0
      %v682 = vadd.f32 %v506, %v681
      %v683 = vpop.f32.mrb[0].mxu0
      %684 = vmatprep.mubr.f32.mxu0 0.0
      %v685 = vand.u32 %v123, 4294901760
      %v686 = vsub.f32 %v123, %v685
      %687 = vmatmul.mubr.f32.gmra.mrb[0].mxu0 %v686
      %v688 = vpop.f32.mrb[0].mxu0
      %v689 = vadd.f32 %v512, %v688
      %v690 = vpop.f32.mrb[0].mxu0
      %691 = vmatprep.mubr.f32.mxu0 0.0
      %v692 = vand.u32 %v126, 4294901760
      %v693 = vsub.f32 %v126, %v692
      %694 = vmatmul.mubr.f32.gmra.mrb[0].mxu0 %v693
      %v695 = vpop.f32.mrb[0].mxu0
      %v696 = vadd.f32 %v518, %v695
      %v697 = vpop.f32.mrb[0].mxu0
      %698 = vmatprep.mubr.f32.mxu0 0.0
      %v699 = vand.u32 %v129, 4294901760
      %v700 = vsub.f32 %v129, %v699
      %701 = vmatmul.mubr.f32.gmra.mrb[0].mxu0 %v700
      %v702 = vpop.f32.mrb[0].mxu0
      %v703 = vadd.f32 %v524, %v702
      %v704 = vpop.f32.mrb[0].mxu0
      %705 = vmatprep.mubr.f32.mxu0 0.0
      %v706 = vand.u32 %v132, 4294901760
      %v707 = vsub.f32 %v132, %v706
      %708 = vmatmul.mubr.f32.gmra.mrb[0].mxu0 %v707
      %v709 = vpop.f32.mrb[0].mxu0
      %v710 = vadd.f32 %v530, %v709
      %v711 = vpop.f32.mrb[0].mxu0
      %712 = vmatprep.mubr.f32.mxu0 0.0
      %v713 = vand.u32 %v135, 4294901760
      %v714 = vsub.f32 %v135, %v713
      %715 = vmatmul.mubr.f32.gmra.mrb[0].mxu0 %v714
      %v716 = vpop.f32.mrb[0].mxu0
      %v717 = vadd.f32 %v536, %v716
      %v718 = vpop.f32.mrb[0].mxu0
      %719 = vmatprep.mubr.f32.mxu0 0.0
      %v720 = vand.u32 %v138, 4294901760
      %v721 = vsub.f32 %v138, %v720
      %722 = vmatmul.mubr.f32.gmra.mrb[0].mxu0 %v721
      %v723 = vpop.f32.mrb[0].mxu0
      %v724 = vadd.f32 %v542, %v723
      %v725 = vpop.f32.mrb[0].mxu0
      %726 = vmatprep.mubr.f32.mxu0 0.0
      %v727 = vand.u32 %v141, 4294901760
      %v728 = vsub.f32 %v141, %v727
      %729 = vmatmul.mubr.f32.gmra.mrb[0].mxu0 %v728
      %v730 = vpop.f32.mrb[0].mxu0
      %v731 = vadd.f32 %v548, %v730
      %v732 = vpop.f32.mrb[0].mxu0
      %733 = vmatprep.mubr.f32.mxu0 0.0
      %v734 = vand.u32 %v144, 4294901760
      %v735 = vsub.f32 %v144, %v734
      %736 = vmatmul.mubr.f32.gmra.mrb[0].mxu0 %v735
      %v737 = vpop.f32.mrb[0].mxu0
      %v738 = vadd.f32 %v554, %v737
      %v739 = vpop.f32.mrb[0].mxu0
      %740 = vmatprep.mubr.f32.mxu0 0.0
      %v741 = vand.u32 %v147, 4294901760
      %v742 = vsub.f32 %v147, %v741
      %743 = vmatmul.mubr.f32.gmra.mrb[0].mxu0 %v742
      %v744 = vpop.f32.mrb[0].mxu0
      %v745 = vadd.f32 %v560, %v744
      %v746 = vpop.f32.mrb[0].mxu0
      %747 = vmatprep.mubr.f32.mxu0 0.0
      %v748 = vand.u32 %v150, 4294901760
      %v749 = vsub.f32 %v150, %v748
      %750 = vmatmul.mubr.f32.gmra.mrb[0].mxu0 %v749
      %v751 = vpop.f32.mrb[0].mxu0
      %v752 = vadd.f32 %v566, %v751
      %v753 = vpop.f32.mrb[0].mxu0
      %754 = vmatprep.mubr.f32.mxu0 0.0
      %v755 = vand.u32 %v153, 4294901760
      %v756 = vsub.f32 %v153, %v755
      %757 = vmatmul.mubr.f32.gmra.mrb[0].mxu0 %v756
      %v758 = vpop.f32.mrb[0].mxu0
      %v759 = vadd.f32 %v572, %v758
      %v760 = vpop.f32.mrb[0].mxu0
      %761 = vmatprep.mubr.f32.mxu0 0.0
      %v762 = vand.u32 %v156, 4294901760
      %v763 = vsub.f32 %v156, %v762
      %764 = vmatmul.mubr.f32.gmra.mrb[0].mxu0 %v763
      %v765 = vpop.f32.mrb[0].mxu0
      %v766 = vadd.f32 %v578, %v765
      %v767 = vpop.f32.mrb[0].mxu0
      %768 = vmatprep.mubr.f32.mxu0 0.0
      %v769 = vand.u32 %v159, 4294901760
      %v770 = vsub.f32 %v159, %v769
      %771 = vmatmul.mubr.f32.gmra.mrb[0].mxu0 %v770
      %v772 = vpop.f32.mrb[0].mxu0
      %v773 = vadd.f32 %v584, %v772
      %v774 = vpop.f32.mrb[0].mxu0
      %775 = vmatprep.mubr.f32.mxu0 0.0
      %v776 = vand.u32 %v162, 4294901760
      %v777 = vsub.f32 %v162, %v776
      %778 = vmatmul.mubr.f32.gmra.mrb[0].mxu0 %v777
      %v779 = vpop.f32.mrb[0].mxu0
      %v780 = vadd.f32 %v590, %v779
      %v781 = vpop.f32.mrb[0].mxu0
      %782 = vmatprep.mubr.f32.mxu0 0.0
      %v783 = vand.u32 %v165, 4294901760
      %v784 = vsub.f32 %v165, %v783
      %785 = vmatmul.mubr.f32.gmra.mrb[0].mxu0 %v784
      %v786 = vpop.f32.mrb[0].mxu0
      %v787 = vadd.f32 %v596, %v786
      %v788 = vpop.f32.mrb[0].mxu0
      %789 = vdwg.mxu0
      %790 = vmatprep.subr.mxu0 0.0
      %v791 = vand.u32 %v63, 4294901760
      %792 = vmatpush1.msra.mxu0 %v791
      %793 = vmatprep.subr.mxu0 0.0
      %v794 = vand.u32 %v64, 4294901760
      %795 = vmatpush1.msra.mxu0 %v794
      %796 = vmatprep.subr.mxu0 0.0
      %v797 = vand.u32 %v65, 4294901760
      %798 = vmatpush1.msra.mxu0 %v797
      %799 = vmatprep.subr.mxu0 0.0
      %v800 = vand.u32 %v66, 4294901760
      %801 = vmatpush1.msra.mxu0 %v800
      %802 = vmatprep.subr.mxu0 0.0
      %v803 = vand.u32 %v67, 4294901760
      %804 = vmatpush1.msra.mxu0 %v803
      %805 = vmatprep.subr.mxu0 0.0
      %v806 = vand.u32 %v68, 4294901760
      %807 = vmatpush1.msra.mxu0 %v806
      %808 = vmatprep.subr.mxu0 0.0
      %v809 = vand.u32 %v169, 4294901760
      %810 = vmatpush1.msra.mxu0 %v809
      %811 = vmatprep.subr.mxu0 0.0
      %812 = vmatpush1.msra.mxu0 0.0
      %813 = vmatprep.subr.mxu0 0.0
      %814 = vmatpush1.msra.mxu0 0.0
      %815 = vmatprep.subr.mxu0 0.0
      %816 = vmatpush1.msra.mxu0 0.0
      %817 = vmatprep.subr.mxu0 0.0
      %818 = vmatpush1.msra.mxu0 0.0
      %819 = vmatprep.subr.mxu0 0.0
      %820 = vmatpush1.msra.mxu0 0.0
      %821 = vmatprep.subr.mxu0 0.0
      %822 = vmatpush1.msra.mxu0 0.0
      %823 = vmatprep.subr.mxu0 0.0
      %824 = vmatpush1.msra.mxu0 0.0
      %825 = vmatprep.subr.mxu0 0.0
      %826 = vmatpush1.msra.mxu0 0.0
      %827 = vmatprep.subr.mxu0 0.0
      %828 = vmatpush1.msra.mxu0 0.0
      %829 = vmatprep.subr.mxu0 0.0
      %830 = vmatpush1.msra.mxu0 0.0
      %831 = vmatprep.subr.mxu0 0.0
      %832 = vmatpush1.msra.mxu0 0.0
      %833 = vmatprep.subr.mxu0 0.0
      %834 = vmatpush1.msra.mxu0 0.0
      %835 = vmatprep.subr.mxu0 0.0
      %836 = vmatpush1.msra.mxu0 0.0
      %837 = vmatprep.subr.mxu0 0.0
      %838 = vmatpush1.msra.mxu0 0.0
      %839 = vmatprep.subr.mxu0 0.0
      %840 = vmatpush1.msra.mxu0 0.0
      %841 = vmatprep.subr.mxu0 0.0
      %842 = vmatpush1.msra.mxu0 0.0
      %843 = vmatprep.subr.mxu0 0.0
      %844 = vmatpush1.msra.mxu0 0.0
      %845 = vmatprep.subr.mxu0 0.0
      %846 = vmatpush1.msra.mxu0 0.0
      %847 = vmatprep.subr.mxu0 0.0
      %848 = vmatpush1.msra.mxu0 0.0
      %849 = vmatprep.subr.mxu0 0.0
      %850 = vmatpush1.msra.mxu0 0.0
      %851 = vmatprep.subr.mxu0 0.0
      %852 = vmatpush1.msra.mxu0 0.0
      %853 = vmatprep.subr.mxu0 0.0
      %854 = vmatpush1.msra.mxu0 0.0
      %855 = vmatprep.subr.mxu0 0.0
      %856 = vmatpush1.msra.mxu0 0.0
      %857 = vmatprep.subr.mxu0 0.0
      %858 = vmatpush1.msra.mxu0 0.0
      %859 = vmatprep.subr.mxu0 0.0
      %860 = vmatpush1.msra.mxu0 0.0
      %861 = vmatprep.mubr.f32.mxu0 0.0
      %v862 = vand.u32 %v120, 4294901760
      %v863 = vsub.f32 %v120, %v862
      %v864 = vand.u32 %v863, 4294901760
      %865 = vmatmul.mubr.f32.gmra.mrb[0].mxu0 %v864
      %v866 = vpop.f32.mrb[0].mxu0
      %v867 = vadd.f32 %v682, %v866
      %v868 = vpop.f32.mrb[0].mxu0
      %869 = vmatprep.mubr.f32.mxu0 0.0
      %v870 = vand.u32 %v123, 4294901760
      %v871 = vsub.f32 %v123, %v870
      %v872 = vand.u32 %v871, 4294901760
      %873 = vmatmul.mubr.f32.gmra.mrb[0].mxu0 %v872
      %v874 = vpop.f32.mrb[0].mxu0
      %v875 = vadd.f32 %v689, %v874
      %v876 = vpop.f32.mrb[0].mxu0
      %877 = vmatprep.mubr.f32.mxu0 0.0
      %v878 = vand.u32 %v126, 4294901760
      %v879 = vsub.f32 %v126, %v878
      %v880 = vand.u32 %v879, 4294901760
      %881 = vmatmul.mubr.f32.gmra.mrb[0].mxu0 %v880
      %v882 = vpop.f32.mrb[0].mxu0
      %v883 = vadd.f32 %v696, %v882
      %v884 = vpop.f32.mrb[0].mxu0
      %885 = vmatprep.mubr.f32.mxu0 0.0
      %v886 = vand.u32 %v129, 4294901760
      %v887 = vsub.f32 %v129, %v886
      %v888 = vand.u32 %v887, 4294901760
      %889 = vmatmul.mubr.f32.gmra.mrb[0].mxu0 %v888
      %v890 = vpop.f32.mrb[0].mxu0
      %v891 = vadd.f32 %v703, %v890
      %v892 = vpop.f32.mrb[0].mxu0
      %893 = vmatprep.mubr.f32.mxu0 0.0
      %v894 = vand.u32 %v132, 4294901760
      %v895 = vsub.f32 %v132, %v894
      %v896 = vand.u32 %v895, 4294901760
      %897 = vmatmul.mubr.f32.gmra.mrb[0].mxu0 %v896
      %v898 = vpop.f32.mrb[0].mxu0
      %v899 = vadd.f32 %v710, %v898
      %v900 = vpop.f32.mrb[0].mxu0
      %901 = vmatprep.mubr.f32.mxu0 0.0
      %v902 = vand.u32 %v135, 4294901760
      %v903 = vsub.f32 %v135, %v902
      %v904 = vand.u32 %v903, 4294901760
      %905 = vmatmul.mubr.f32.gmra.mrb[0].mxu0 %v904
      %v906 = vpop.f32.mrb[0].mxu0
      %v907 = vadd.f32 %v717, %v906
      %v908 = vpop.f32.mrb[0].mxu0
      %909 = vmatprep.mubr.f32.mxu0 0.0
      %v910 = vand.u32 %v138, 4294901760
      %v911 = vsub.f32 %v138, %v910
      %v912 = vand.u32 %v911, 4294901760
      %913 = vmatmul.mubr.f32.gmra.mrb[0].mxu0 %v912
      %v914 = vpop.f32.mrb[0].mxu0
      %v915 = vadd.f32 %v724, %v914
      %v916 = vpop.f32.mrb[0].mxu0
      %917 = vmatprep.mubr.f32.mxu0 0.0
      %v918 = vand.u32 %v141, 4294901760
      %v919 = vsub.f32 %v141, %v918
      %v920 = vand.u32 %v919, 4294901760
      %921 = vmatmul.mubr.f32.gmra.mrb[0].mxu0 %v920
      %v922 = vpop.f32.mrb[0].mxu0
      %v923 = vadd.f32 %v731, %v922
      %v924 = vpop.f32.mrb[0].mxu0
      %925 = vmatprep.mubr.f32.mxu0 0.0
      %v926 = vand.u32 %v144, 4294901760
      %v927 = vsub.f32 %v144, %v926
      %v928 = vand.u32 %v927, 4294901760
      %929 = vmatmul.mubr.f32.gmra.mrb[0].mxu0 %v928
      %v930 = vpop.f32.mrb[0].mxu0
      %v931 = vadd.f32 %v738, %v930
      %v932 = vpop.f32.mrb[0].mxu0
      %933 = vmatprep.mubr.f32.mxu0 0.0
      %v934 = vand.u32 %v147, 4294901760
      %v935 = vsub.f32 %v147, %v934
      %v936 = vand.u32 %v935, 4294901760
      %937 = vmatmul.mubr.f32.gmra.mrb[0].mxu0 %v936
      %v938 = vpop.f32.mrb[0].mxu0
      %v939 = vadd.f32 %v745, %v938
      %v940 = vpop.f32.mrb[0].mxu0
      %941 = vmatprep.mubr.f32.mxu0 0.0
      %v942 = vand.u32 %v150, 4294901760
      %v943 = vsub.f32 %v150, %v942
      %v944 = vand.u32 %v943, 4294901760
      %945 = vmatmul.mubr.f32.gmra.mrb[0].mxu0 %v944
      %v946 = vpop.f32.mrb[0].mxu0
      %v947 = vadd.f32 %v752, %v946
      %v948 = vpop.f32.mrb[0].mxu0
      %949 = vmatprep.mubr.f32.mxu0 0.0
      %v950 = vand.u32 %v153, 4294901760
      %v951 = vsub.f32 %v153, %v950
      %v952 = vand.u32 %v951, 4294901760
      %953 = vmatmul.mubr.f32.gmra.mrb[0].mxu0 %v952
      %v954 = vpop.f32.mrb[0].mxu0
      %v955 = vadd.f32 %v759, %v954
      %v956 = vpop.f32.mrb[0].mxu0
      %957 = vmatprep.mubr.f32.mxu0 0.0
      %v958 = vand.u32 %v156, 4294901760
      %v959 = vsub.f32 %v156, %v958
      %v960 = vand.u32 %v959, 4294901760
      %961 = vmatmul.mubr.f32.gmra.mrb[0].mxu0 %v960
      %v962 = vpop.f32.mrb[0].mxu0
      %v963 = vadd.f32 %v766, %v962
      %v964 = vpop.f32.mrb[0].mxu0
      %965 = vmatprep.mubr.f32.mxu0 0.0
      %v966 = vand.u32 %v159, 4294901760
      %v967 = vsub.f32 %v159, %v966
      %v968 = vand.u32 %v967, 4294901760
      %969 = vmatmul.mubr.f32.gmra.mrb[0].mxu0 %v968
      %v970 = vpop.f32.mrb[0].mxu0
      %v971 = vadd.f32 %v773, %v970
      %v972 = vpop.f32.mrb[0].mxu0
      %973 = vmatprep.mubr.f32.mxu0 0.0
      %v974 = vand.u32 %v162, 4294901760
      %v975 = vsub.f32 %v162, %v974
      %v976 = vand.u32 %v975, 4294901760
      %977 = vmatmul.mubr.f32.gmra.mrb[0].mxu0 %v976
      %v978 = vpop.f32.mrb[0].mxu0
      %v979 = vadd.f32 %v780, %v978
      %v980 = vpop.f32.mrb[0].mxu0
      %981 = vmatprep.mubr.f32.mxu0 0.0
      %v982 = vand.u32 %v165, 4294901760
      %v983 = vsub.f32 %v165, %v982
      %v984 = vand.u32 %v983, 4294901760
      %985 = vmatmul.mubr.f32.gmra.mrb[0].mxu0 %v984
      %v986 = vpop.f32.mrb[0].mxu0
      %v987 = vadd.f32 %v787, %v986
      %v988 = vpop.f32.mrb[0].mxu0
      %989 = vdwg.mxu0
      %990 = vmatprep.subr.mxu0 0.0
      %v991 = vand.u32 %v63, 4294901760
      %v992 = vsub.f32 %v63, %v991
      %v993 = vand.u32 %v992, 4294901760
      %994 = vmatpush1.msra.mxu0 %v993
      %995 = vmatprep.subr.mxu0 0.0
      %v996 = vand.u32 %v64, 4294901760
      %v997 = vsub.f32 %v64, %v996
      %v998 = vand.u32 %v997, 4294901760
      %999 = vmatpush1.msra.mxu0 %v998
      %1000 = vmatprep.subr.mxu0 0.0
      %v1001 = vand.u32 %v65, 4294901760
      %v1002 = vsub.f32 %v65, %v1001
      %v1003 = vand.u32 %v1002, 4294901760
      %1004 = vmatpush1.msra.mxu0 %v1003
      %1005 = vmatprep.subr.mxu0 0.0
      %v1006 = vand.u32 %v66, 4294901760
      %v1007 = vsub.f32 %v66, %v1006
      %v1008 = vand.u32 %v1007, 4294901760
      %1009 = vmatpush1.msra.mxu0 %v1008
      %1010 = vmatprep.subr.mxu0 0.0
      %v1011 = vand.u32 %v67, 4294901760
      %v1012 = vsub.f32 %v67, %v1011
      %v1013 = vand.u32 %v1012, 4294901760
      %1014 = vmatpush1.msra.mxu0 %v1013
      %1015 = vmatprep.subr.mxu0 0.0
      %v1016 = vand.u32 %v68, 4294901760
      %v1017 = vsub.f32 %v68, %v1016
      %v1018 = vand.u32 %v1017, 4294901760
      %1019 = vmatpush1.msra.mxu0 %v1018
      %1020 = vmatprep.subr.mxu0 0.0
      %v1021 = vand.u32 %v169, 4294901760
      %v1022 = vsub.f32 %v169, %v1021
      %v1023 = vand.u32 %v1022, 4294901760
      %1024 = vmatpush1.msra.mxu0 %v1023
      %1025 = vmatprep.subr.mxu0 0.0
      %1026 = vmatpush1.msra.mxu0 0.0
      %1027 = vmatprep.subr.mxu0 0.0
      %1028 = vmatpush1.msra.mxu0 0.0
      %1029 = vmatprep.subr.mxu0 0.0
      %1030 = vmatpush1.msra.mxu0 0.0
      %1031 = vmatprep.subr.mxu0 0.0
      %1032 = vmatpush1.msra.mxu0 0.0
      %1033 = vmatprep.subr.mxu0 0.0
      %1034 = vmatpush1.msra.mxu0 0.0
      %1035 = vmatprep.subr.mxu0 0.0
      %1036 = vmatpush1.msra.mxu0 0.0
      %1037 = vmatprep.subr.mxu0 0.0
      %1038 = vmatpush1.msra.mxu0 0.0
      %1039 = vmatprep.subr.mxu0 0.0
      %1040 = vmatpush1.msra.mxu0 0.0
      %1041 = vmatprep.subr.mxu0 0.0
      %1042 = vmatpush1.msra.mxu0 0.0
      %1043 = vmatprep.subr.mxu0 0.0
      %1044 = vmatpush1.msra.mxu0 0.0
      %1045 = vmatprep.subr.mxu0 0.0
      %1046 = vmatpush1.msra.mxu0 0.0
      %1047 = vmatprep.subr.mxu0 0.0
      %1048 = vmatpush1.msra.mxu0 0.0
      %1049 = vmatprep.subr.mxu0 0.0
      %1050 = vmatpush1.msra.mxu0 0.0
      %1051 = vmatprep.subr.mxu0 0.0
      %1052 = vmatpush1.msra.mxu0 0.0
      %1053 = vmatprep.subr.mxu0 0.0
      %1054 = vmatpush1.msra.mxu0 0.0
      %1055 = vmatprep.subr.mxu0 0.0
      %1056 = vmatpush1.msra.mxu0 0.0
      %1057 = vmatprep.subr.mxu0 0.0
      %1058 = vmatpush1.msra.mxu0 0.0
      %1059 = vmatprep.subr.mxu0 0.0
      %1060 = vmatpush1.msra.mxu0 0.0
      %1061 = vmatprep.subr.mxu0 0.0
      %1062 = vmatpush1.msra.mxu0 0.0
      %1063 = vmatprep.subr.mxu0 0.0
      %1064 = vmatpush1.msra.mxu0 0.0
      %1065 = vmatprep.subr.mxu0 0.0
      %1066 = vmatpush1.msra.mxu0 0.0
      %1067 = vmatprep.subr.mxu0 0.0
      %1068 = vmatpush1.msra.mxu0 0.0
      %1069 = vmatprep.subr.mxu0 0.0
      %1070 = vmatpush1.msra.mxu0 0.0
      %1071 = vmatprep.subr.mxu0 0.0
      %1072 = vmatpush1.msra.mxu0 0.0
      %1073 = vmatprep.subr.mxu0 0.0
      %1074 = vmatpush1.msra.mxu0 0.0
      %1075 = vmatprep.mubr.f32.mxu0 0.0
      %v1076 = vand.u32 %v120, 4294901760
      %1077 = vmatmul.mubr.f32.gmra.mrb[0].mxu0 %v1076
      %v1078 = vpop.f32.mrb[0].mxu0
      %v1079 = vadd.f32 %v867, %v1078
      %v1080 = vpop.f32.mrb[0].mxu0
      %1081 = vmatprep.mubr.f32.mxu0 0.0
      %v1082 = vand.u32 %v123, 4294901760
      %1083 = vmatmul.mubr.f32.gmra.mrb[0].mxu0 %v1082
      %v1084 = vpop.f32.mrb[0].mxu0
      %v1085 = vadd.f32 %v875, %v1084
      %v1086 = vpop.f32.mrb[0].mxu0
      %1087 = vmatprep.mubr.f32.mxu0 0.0
      %v1088 = vand.u32 %v126, 4294901760
      %1089 = vmatmul.mubr.f32.gmra.mrb[0].mxu0 %v1088
      %v1090 = vpop.f32.mrb[0].mxu0
      %v1091 = vadd.f32 %v883, %v1090
      %v1092 = vpop.f32.mrb[0].mxu0
      %1093 = vmatprep.mubr.f32.mxu0 0.0
      %v1094 = vand.u32 %v129, 4294901760
      %1095 = vmatmul.mubr.f32.gmra.mrb[0].mxu0 %v1094
      %v1096 = vpop.f32.mrb[0].mxu0
      %v1097 = vadd.f32 %v891, %v1096
      %v1098 = vpop.f32.mrb[0].mxu0
      %1099 = vmatprep.mubr.f32.mxu0 0.0
      %v1100 = vand.u32 %v132, 4294901760
      %1101 = vmatmul.mubr.f32.gmra.mrb[0].mxu0 %v1100
      %v1102 = vpop.f32.mrb[0].mxu0
      %v1103 = vadd.f32 %v899, %v1102
      %v1104 = vpop.f32.mrb[0].mxu0
      %1105 = vmatprep.mubr.f32.mxu0 0.0
      %v1106 = vand.u32 %v135, 4294901760
      %1107 = vmatmul.mubr.f32.gmra.mrb[0].mxu0 %v1106
      %v1108 = vpop.f32.mrb[0].mxu0
      %v1109 = vadd.f32 %v907, %v1108
      %v1110 = vpop.f32.mrb[0].mxu0
      %1111 = vmatprep.mubr.f32.mxu0 0.0
      %v1112 = vand.u32 %v138, 4294901760
      %1113 = vmatmul.mubr.f32.gmra.mrb[0].mxu0 %v1112
      %v1114 = vpop.f32.mrb[0].mxu0
      %v1115 = vadd.f32 %v915, %v1114
      %v1116 = vpop.f32.mrb[0].mxu0
      %1117 = vmatprep.mubr.f32.mxu0 0.0
      %v1118 = vand.u32 %v141, 4294901760
      %1119 = vmatmul.mubr.f32.gmra.mrb[0].mxu0 %v1118
      %v1120 = vpop.f32.mrb[0].mxu0
      %v1121 = vadd.f32 %v923, %v1120
      %v1122 = vpop.f32.mrb[0].mxu0
      %1123 = vmatprep.mubr.f32.mxu0 0.0
      %v1124 = vand.u32 %v144, 4294901760
      %1125 = vmatmul.mubr.f32.gmra.mrb[0].mxu0 %v1124
      %v1126 = vpop.f32.mrb[0].mxu0
      %v1127 = vadd.f32 %v931, %v1126
      %v1128 = vpop.f32.mrb[0].mxu0
      %1129 = vmatprep.mubr.f32.mxu0 0.0
      %v1130 = vand.u32 %v147, 4294901760
      %1131 = vmatmul.mubr.f32.gmra.mrb[0].mxu0 %v1130
      %v1132 = vpop.f32.mrb[0].mxu0
      %v1133 = vadd.f32 %v939, %v1132
      %v1134 = vpop.f32.mrb[0].mxu0
      %1135 = vmatprep.mubr.f32.mxu0 0.0
      %v1136 = vand.u32 %v150, 4294901760
      %1137 = vmatmul.mubr.f32.gmra.mrb[0].mxu0 %v1136
      %v1138 = vpop.f32.mrb[0].mxu0
      %v1139 = vadd.f32 %v947, %v1138
      %v1140 = vpop.f32.mrb[0].mxu0
      %1141 = vmatprep.mubr.f32.mxu0 0.0
      %v1142 = vand.u32 %v153, 4294901760
      %1143 = vmatmul.mubr.f32.gmra.mrb[0].mxu0 %v1142
      %v1144 = vpop.f32.mrb[0].mxu0
      %v1145 = vadd.f32 %v955, %v1144
      %v1146 = vpop.f32.mrb[0].mxu0
      %1147 = vmatprep.mubr.f32.mxu0 0.0
      %v1148 = vand.u32 %v156, 4294901760
      %1149 = vmatmul.mubr.f32.gmra.mrb[0].mxu0 %v1148
      %v1150 = vpop.f32.mrb[0].mxu0
      %v1151 = vadd.f32 %v963, %v1150
      %v1152 = vpop.f32.mrb[0].mxu0
      %1153 = vmatprep.mubr.f32.mxu0 0.0
      %v1154 = vand.u32 %v159, 4294901760
      %1155 = vmatmul.mubr.f32.gmra.mrb[0].mxu0 %v1154
      %v1156 = vpop.f32.mrb[0].mxu0
      %v1157 = vadd.f32 %v971, %v1156
      %v1158 = vpop.f32.mrb[0].mxu0
      %1159 = vmatprep.mubr.f32.mxu0 0.0
      %v1160 = vand.u32 %v162, 4294901760
      %1161 = vmatmul.mubr.f32.gmra.mrb[0].mxu0 %v1160
      %v1162 = vpop.f32.mrb[0].mxu0
      %v1163 = vadd.f32 %v979, %v1162
      %v1164 = vpop.f32.mrb[0].mxu0
      %1165 = vmatprep.mubr.f32.mxu0 0.0
      %v1166 = vand.u32 %v165, 4294901760
      %1167 = vmatmul.mubr.f32.gmra.mrb[0].mxu0 %v1166
      %v1168 = vpop.f32.mrb[0].mxu0
      %v1169 = vadd.f32 %v987, %v1168
      %v1170 = vpop.f32.mrb[0].mxu0
      %1171 = vdwg.mxu0
      %1172 = vmatprep.subr.mxu0 0.0
      %v1173 = vand.u32 %v63, 4294901760
      %1174 = vmatpush1.msra.mxu0 %v1173
      %1175 = vmatprep.subr.mxu0 0.0
      %v1176 = vand.u32 %v64, 4294901760
      %1177 = vmatpush1.msra.mxu0 %v1176
      %1178 = vmatprep.subr.mxu0 0.0
      %v1179 = vand.u32 %v65, 4294901760
      %1180 = vmatpush1.msra.mxu0 %v1179
      %1181 = vmatprep.subr.mxu0 0.0
      %v1182 = vand.u32 %v66, 4294901760
      %1183 = vmatpush1.msra.mxu0 %v1182
      %1184 = vmatprep.subr.mxu0 0.0
      %v1185 = vand.u32 %v67, 4294901760
      %1186 = vmatpush1.msra.mxu0 %v1185
      %1187 = vmatprep.subr.mxu0 0.0
      %v1188 = vand.u32 %v68, 4294901760
      %1189 = vmatpush1.msra.mxu0 %v1188
      %1190 = vmatprep.subr.mxu0 0.0
      %v1191 = vand.u32 %v169, 4294901760
      %1192 = vmatpush1.msra.mxu0 %v1191
      %1193 = vmatprep.subr.mxu0 0.0
      %1194 = vmatpush1.msra.mxu0 0.0
      %1195 = vmatprep.subr.mxu0 0.0
      %1196 = vmatpush1.msra.mxu0 0.0
      %1197 = vmatprep.subr.mxu0 0.0
      %1198 = vmatpush1.msra.mxu0 0.0
      %1199 = vmatprep.subr.mxu0 0.0
      %1200 = vmatpush1.msra.mxu0 0.0
      %1201 = vmatprep.subr.mxu0 0.0
      %1202 = vmatpush1.msra.mxu0 0.0
      %1203 = vmatprep.subr.mxu0 0.0
      %1204 = vmatpush1.msra.mxu0 0.0
      %1205 = vmatprep.subr.mxu0 0.0
      %1206 = vmatpush1.msra.mxu0 0.0
      %1207 = vmatprep.subr.mxu0 0.0
      %1208 = vmatpush1.msra.mxu0 0.0
      %1209 = vmatprep.subr.mxu0 0.0
      %1210 = vmatpush1.msra.mxu0 0.0
      %1211 = vmatprep.subr.mxu0 0.0
      %1212 = vmatpush1.msra.mxu0 0.0
      %1213 = vmatprep.subr.mxu0 0.0
      %1214 = vmatpush1.msra.mxu0 0.0
      %1215 = vmatprep.subr.mxu0 0.0
      %1216 = vmatpush1.msra.mxu0 0.0
      %1217 = vmatprep.subr.mxu0 0.0
      %1218 = vmatpush1.msra.mxu0 0.0
      %1219 = vmatprep.subr.mxu0 0.0
      %1220 = vmatpush1.msra.mxu0 0.0
      %1221 = vmatprep.subr.mxu0 0.0
      %1222 = vmatpush1.msra.mxu0 0.0
      %1223 = vmatprep.subr.mxu0 0.0
      %1224 = vmatpush1.msra.mxu0 0.0
      %1225 = vmatprep.subr.mxu0 0.0
      %1226 = vmatpush1.msra.mxu0 0.0
      %1227 = vmatprep.subr.mxu0 0.0
      %1228 = vmatpush1.msra.mxu0 0.0
      %1229 = vmatprep.subr.mxu0 0.0
      %1230 = vmatpush1.msra.mxu0 0.0
      %1231 = vmatprep.subr.mxu0 0.0
      %1232 = vmatpush1.msra.mxu0 0.0
      %1233 = vmatprep.subr.mxu0 0.0
      %1234 = vmatpush1.msra.mxu0 0.0
      %1235 = vmatprep.subr.mxu0 0.0
      %1236 = vmatpush1.msra.mxu0 0.0
      %1237 = vmatprep.subr.mxu0 0.0
      %1238 = vmatpush1.msra.mxu0 0.0
      %1239 = vmatprep.subr.mxu0 0.0
      %1240 = vmatpush1.msra.mxu0 0.0
      %1241 = vmatprep.subr.mxu0 0.0
      %1242 = vmatpush1.msra.mxu0 0.0
      %1243 = vmatprep.mubr.f32.mxu0 0.0
      %v1244 = vand.u32 %v120, 4294901760
      %1245 = vmatmul.mubr.f32.gmra.mrb[0].mxu0 %v1244
      %v1246 = vpop.f32.mrb[0].mxu0
      %v1247 = vadd.f32 %v1079, %v1246
      %v1248 = vpop.f32.mrb[0].mxu0
      %1249 = vmatprep.mubr.f32.mxu0 0.0
      %v1250 = vand.u32 %v123, 4294901760
      %1251 = vmatmul.mubr.f32.gmra.mrb[0].mxu0 %v1250
      %v1252 = vpop.f32.mrb[0].mxu0
      %v1253 = vadd.f32 %v1085, %v1252
      %v1254 = vpop.f32.mrb[0].mxu0
      %1255 = vmatprep.mubr.f32.mxu0 0.0
      %v1256 = vand.u32 %v126, 4294901760
      %1257 = vmatmul.mubr.f32.gmra.mrb[0].mxu0 %v1256
      %v1258 = vpop.f32.mrb[0].mxu0
      %v1259 = vadd.f32 %v1091, %v1258
      %v1260 = vpop.f32.mrb[0].mxu0
      %1261 = vmatprep.mubr.f32.mxu0 0.0
      %v1262 = vand.u32 %v129, 4294901760
      %1263 = vmatmul.mubr.f32.gmra.mrb[0].mxu0 %v1262
      %v1264 = vpop.f32.mrb[0].mxu0
      %v1265 = vadd.f32 %v1097, %v1264
      %v1266 = vpop.f32.mrb[0].mxu0
      %1267 = vmatprep.mubr.f32.mxu0 0.0
      %v1268 = vand.u32 %v132, 4294901760
      %1269 = vmatmul.mubr.f32.gmra.mrb[0].mxu0 %v1268
      %v1270 = vpop.f32.mrb[0].mxu0
      %v1271 = vadd.f32 %v1103, %v1270
      %v1272 = vpop.f32.mrb[0].mxu0
      %1273 = vmatprep.mubr.f32.mxu0 0.0
      %v1274 = vand.u32 %v135, 4294901760
      %1275 = vmatmul.mubr.f32.gmra.mrb[0].mxu0 %v1274
      %v1276 = vpop.f32.mrb[0].mxu0
      %v1277 = vadd.f32 %v1109, %v1276
      %v1278 = vpop.f32.mrb[0].mxu0
      %1279 = vmatprep.mubr.f32.mxu0 0.0
      %v1280 = vand.u32 %v138, 4294901760
      %1281 = vmatmul.mubr.f32.gmra.mrb[0].mxu0 %v1280
      %v1282 = vpop.f32.mrb[0].mxu0
      %v1283 = vadd.f32 %v1115, %v1282
      %v1284 = vpop.f32.mrb[0].mxu0
      %1285 = vmatprep.mubr.f32.mxu0 0.0
      %v1286 = vand.u32 %v141, 4294901760
      %1287 = vmatmul.mubr.f32.gmra.mrb[0].mxu0 %v1286
      %v1288 = vpop.f32.mrb[0].mxu0
      %v1289 = vadd.f32 %v1121, %v1288
      %v1290 = vpop.f32.mrb[0].mxu0
      %1291 = vmatprep.mubr.f32.mxu0 0.0
      %v1292 = vand.u32 %v144, 4294901760
      %1293 = vmatmul.mubr.f32.gmra.mrb[0].mxu0 %v1292
      %v1294 = vpop.f32.mrb[0].mxu0
      %v1295 = vadd.f32 %v1127, %v1294
      %v1296 = vpop.f32.mrb[0].mxu0
      %1297 = vmatprep.mubr.f32.mxu0 0.0
      %v1298 = vand.u32 %v147, 4294901760
      %1299 = vmatmul.mubr.f32.gmra.mrb[0].mxu0 %v1298
      %v1300 = vpop.f32.mrb[0].mxu0
      %v1301 = vadd.f32 %v1133, %v1300
      %v1302 = vpop.f32.mrb[0].mxu0
      %1303 = vmatprep.mubr.f32.mxu0 0.0
      %v1304 = vand.u32 %v150, 4294901760
      %1305 = vmatmul.mubr.f32.gmra.mrb[0].mxu0 %v1304
      %v1306 = vpop.f32.mrb[0].mxu0
      %v1307 = vadd.f32 %v1139, %v1306
      %v1308 = vpop.f32.mrb[0].mxu0
      %1309 = vmatprep.mubr.f32.mxu0 0.0
      %v1310 = vand.u32 %v153, 4294901760
      %1311 = vmatmul.mubr.f32.gmra.mrb[0].mxu0 %v1310
      %v1312 = vpop.f32.mrb[0].mxu0
      %v1313 = vadd.f32 %v1145, %v1312
      %v1314 = vpop.f32.mrb[0].mxu0
      %1315 = vmatprep.mubr.f32.mxu0 0.0
      %v1316 = vand.u32 %v156, 4294901760
      %1317 = vmatmul.mubr.f32.gmra.mrb[0].mxu0 %v1316
      %v1318 = vpop.f32.mrb[0].mxu0
      %v1319 = vadd.f32 %v1151, %v1318
      %v1320 = vpop.f32.mrb[0].mxu0
      %1321 = vmatprep.mubr.f32.mxu0 0.0
      %v1322 = vand.u32 %v159, 4294901760
      %1323 = vmatmul.mubr.f32.gmra.mrb[0].mxu0 %v1322
      %v1324 = vpop.f32.mrb[0].mxu0
      %v1325 = vadd.f32 %v1157, %v1324
      %v1326 = vpop.f32.mrb[0].mxu0
      %1327 = vmatprep.mubr.f32.mxu0 0.0
      %v1328 = vand.u32 %v162, 4294901760
      %1329 = vmatmul.mubr.f32.gmra.mrb[0].mxu0 %v1328
      %v1330 = vpop.f32.mrb[0].mxu0
      %v1331 = vadd.f32 %v1163, %v1330
      %v1332 = vpop.f32.mrb[0].mxu0
      %1333 = vmatprep.mubr.f32.mxu0 0.0
      %v1334 = vand.u32 %v165, 4294901760
      %1335 = vmatmul.mubr.f32.gmra.mrb[0].mxu0 %v1334
      %v1336 = vpop.f32.mrb[0].mxu0
      %v1337 = vadd.f32 %v1169, %v1336
      %v1338 = vpop.f32.mrb[0].mxu0
      %1339 = vdwg.mxu0
      %v1340 = vadd.f32 %v70, %v1247
      %v1341 = vadd.f32 %v71, %v1253
      %v1342 = vadd.f32 %v72, %v1259
      %v1343 = vadd.f32 %v73, %v1265
      %v1344 = vadd.f32 %v74, %v1271
      %v1345 = vadd.f32 %v75, %v1277
      %v1346 = vadd.f32 %v76, %v1283
      %v1347 = vadd.f32 %v77, %v1289
      %v1348 = vadd.f32 %v78, %v1295
      %v1349 = vadd.f32 %v79, %v1301
      %v1350 = vadd.f32 %v80, %v1307
      %v1351 = vadd.f32 %v81, %v1313
      %v1352 = vadd.f32 %v82, %v1319
      %v1353 = vadd.f32 %v83, %v1325
      %v1354 = vadd.f32 %v84, %v1331
      %v1355 = vadd.f32 %v85, %v1337
      %1356 = vst [vmem:[#allocation7] sm:$0xff] %v1340
      %1357 = vst [vmem:[#allocation7 + $0x8] sm:$0xff] %v1341
      %1358 = vst [vmem:[#allocation7 + $0x10] sm:$0xff] %v1342
      %1359 = vst [vmem:[#allocation7 + $0x18] sm:$0xff] %v1343
      %1360 = vst [vmem:[#allocation7 + $0x20] sm:$0xff] %v1344
      %1361 = vst [vmem:[#allocation7 + $0x28] sm:$0xff] %v1345
      %1362 = vst [vmem:[#allocation7 + $0x30] sm:$0xff] %v1346
      %1363 = vst [vmem:[#allocation7 + $0x38] sm:$0xff] %v1347
      %1364 = vst [vmem:[#allocation7 + $0x40] sm:$0xff] %v1348
      %1365 = vst [vmem:[#allocation7 + $0x48] sm:$0xff] %v1349
      %1366 = vst [vmem:[#allocation7 + $0x50] sm:$0xff] %v1350
      %1367 = vst [vmem:[#allocation7 + $0x58] sm:$0xff] %v1351
      %1368 = vst [vmem:[#allocation7 + $0x60] sm:$0xff] %v1352
      %1369 = vst [vmem:[#allocation7 + $0x68] sm:$0xff] %v1353
      %1370 = vst [vmem:[#allocation7 + $0x70] sm:$0xff] %v1354
      %1371 = vst [vmem:[#allocation7 + $0x78] sm:$0xff] %v1355
    $region17: #{tpu_custom_call.1} parent=1 // pred_fallthru
      _
    %p1372 = scmp.gt.s32.totalorder %s58, %s57
    // Predicated region
    $region18: #{tpu_custom_call.1} parent=1 // pred_check
      %p1373 = pneg %p1372
    $region19: #{tpu_custom_call.1} parent=1 // pred_check_branch
      %1375 = sbr.rel (%p1373) target = $region21
    $region20: #{tpu_custom_call.1} parent=1 // pred_region
      %v1376 = vlaneseq
      %v1377 = vshrl.u32 %v1376, 7
      %v1378 = vadd.s32 %v1377, 8
      %v1379 = vadd.s32 %v1377, 16
      %v1380 = vadd.s32 %v1377, 24
      %v1381 = vadd.s32 %v1377, 32
      %v1382 = vadd.s32 %v1377, 40
      %v1383 = vadd.s32 %v1377, 48
      %v1384 = vstv %s56
      %v1385 = vadd.s32 %v1377, %v1384
      %v1386 = vadd.s32 %v1378, %v1384
      %v1387 = vadd.s32 %v1379, %v1384
      %v1388 = vadd.s32 %v1380, %v1384
      %v1389 = vadd.s32 %v1381, %v1384
      %v1390 = vadd.s32 %v1382, %v1384
      %v1391 = vadd.s32 %v1383, %v1384
      %v1392 = vstv %s57
      %vm1393 = vcmp.lt.s32.totalorder %v1385, %v1392
      %vm1394 = vcmp.lt.s32.totalorder %v1386, %v1392
      %vm1395 = vcmp.lt.s32.totalorder %v1387, %v1392
      %vm1396 = vcmp.lt.s32.totalorder %v1388, %v1392
      %vm1397 = vcmp.lt.s32.totalorder %v1389, %v1392
      %vm1398 = vcmp.lt.s32.totalorder %v1390, %v1392
      %vm1399 = vcmp.lt.s32.totalorder %v1391, %v1392
      %v1400 = vld [vmem:[#allocation4] sm:$0xff]
      %v1401 = vld [vmem:[#allocation4 + $0x8] sm:$0xff]
      %v1402 = vld [vmem:[#allocation4 + $0x10] sm:$0xff]
      %v1403 = vld [vmem:[#allocation4 + $0x18] sm:$0xff]
      %v1404 = vld [vmem:[#allocation4 + $0x20] sm:$0xff]
      %v1405 = vld [vmem:[#allocation4 + $0x28] sm:$0xff]
      %v1406 = vld [vmem:[#allocation4 + $0x30] sm:$0x3]
      %v1407 = vsel %vm1393, %v1400, 0.0
      %v1408 = vsel %vm1394, %v1401, 0.0
      %v1409 = vsel %vm1395, %v1402, 0.0
      %v1410 = vsel %vm1396, %v1403, 0.0
      %v1411 = vsel %vm1397, %v1404, 0.0
      %v1412 = vsel %vm1398, %v1405, 0.0
      %v1413 = vsel %vm1399, %v1406, 0.0
      %v1414 = vld [vmem:[#allocation7] sm:$0xff]
      %v1415 = vld [vmem:[#allocation7 + $0x8] sm:$0xff]
      %v1416 = vld [vmem:[#allocation7 + $0x10] sm:$0xff]
      %v1417 = vld [vmem:[#allocation7 + $0x18] sm:$0xff]
      %v1418 = vld [vmem:[#allocation7 + $0x20] sm:$0xff]
      %v1419 = vld [vmem:[#allocation7 + $0x28] sm:$0xff]
      %v1420 = vld [vmem:[#allocation7 + $0x30] sm:$0xff]
      %v1421 = vld [vmem:[#allocation7 + $0x38] sm:$0xff]
      %v1422 = vld [vmem:[#allocation7 + $0x40] sm:$0xff]
      %v1423 = vld [vmem:[#allocation7 + $0x48] sm:$0xff]
      %v1424 = vld [vmem:[#allocation7 + $0x50] sm:$0xff]
      %v1425 = vld [vmem:[#allocation7 + $0x58] sm:$0xff]
      %v1426 = vld [vmem:[#allocation7 + $0x60] sm:$0xff]
      %v1427 = vld [vmem:[#allocation7 + $0x68] sm:$0xff]
      %v1428 = vld [vmem:[#allocation7 + $0x70] sm:$0xff]
      %v1429 = vld [vmem:[#allocation7 + $0x78] sm:$0xff]
      %1430 = vxpose.xlu0.b32.start [1/16] %v1407, 128
      %1431 = vxpose.xlu0.b32.cont [2/16] %v1408, 128
      %1432 = vxpose.xlu0.b32.cont [3/16] %v1409, 128
      %1433 = vxpose.xlu0.b32.cont [4/16] %v1410, 128
      %1434 = vxpose.xlu0.b32.cont [5/16] %v1411, 128
      %1435 = vxpose.xlu0.b32.cont [6/16] %v1412, 128
      %1436 = vxpose.xlu0.b32.cont [7/16] %v1413, 128
      %1437 = vxpose.xlu0.b32.cont [8/16] 0.0, 128
      %1438 = vxpose.xlu0.b32.cont [9/16] 0.0, 128
      %1439 = vxpose.xlu0.b32.cont [10/16] 0.0, 128
      %1440 = vxpose.xlu0.b32.cont [11/16] 0.0, 128
      %1441 = vxpose.xlu0.b32.cont [12/16] 0.0, 128
      %1442 = vxpose.xlu0.b32.cont [13/16] 0.0, 128
      %1443 = vxpose.xlu0.b32.cont [14/16] 0.0, 128
      %1444 = vxpose.xlu0.b32.cont [15/16] 0.0, 128
      %1445 = vxpose.xlu0.b32.end [16/16] 0.0, 128
      %v1446 = vpop.trf.xlu0
      %v1447 = vpop.trf.xlu0
      %v1448 = vpop.trf.xlu0
      %v1449 = vpop.trf.xlu0
      %v1450 = vpop.trf.xlu0
      %v1451 = vpop.trf.xlu0
      %v1452 = vpop.trf.xlu0
      %v1453 = vpop.trf.xlu0
      %v1454 = vpop.trf.xlu0
      %v1455 = vpop.trf.xlu0
      %v1456 = vpop.trf.xlu0
      %v1457 = vpop.trf.xlu0
      %v1458 = vpop.trf.xlu0
      %v1459 = vpop.trf.xlu0
      %v1460 = vpop.trf.xlu0
      %v1461 = vpop.trf.xlu0
      %vm1462 = vcmask 408576
      %v1464 = vsel %vm1462, %v1446, 0
      %v1467 = vsel %vm1462, %v1447, 0
      %v1470 = vsel %vm1462, %v1448, 0
      %v1473 = vsel %vm1462, %v1449, 0
      %v1476 = vsel %vm1462, %v1450, 0
      %v1479 = vsel %vm1462, %v1451, 0
      %v1482 = vsel %vm1462, %v1452, 0
      %v1485 = vsel %vm1462, %v1453, 0
      %v1488 = vsel %vm1462, %v1454, 0
      %v1491 = vsel %vm1462, %v1455, 0
      %v1494 = vsel %vm1462, %v1456, 0
      %v1497 = vsel %vm1462, %v1457, 0
      %v1500 = vsel %vm1462, %v1458, 0
      %v1503 = vsel %vm1462, %v1459, 0
      %v1506 = vsel %vm1462, %v1460, 0
      %v1509 = vsel %vm1462, %v1461, 0
      %vm1511 = vcmask 1041408
      %v1513 = vsel %vm1511, %v1413, 0
      %1515 = vmatprep.subr.mxu0 0.0
      %v1516 = vand.u32 %v1407, 4294901760
      %1517 = vmatpush1.msra.mxu0 %v1516
      %1518 = vmatprep.subr.mxu0 0.0
      %v1519 = vand.u32 %v1408, 4294901760
      %1520 = vmatpush1.msra.mxu0 %v1519
      %1521 = vmatprep.subr.mxu0 0.0
      %v1522 = vand.u32 %v1409, 4294901760
      %1523 = vmatpush1.msra.mxu0 %v1522
      %1524 = vmatprep.subr.mxu0 0.0
      %v1525 = vand.u32 %v1410, 4294901760
      %1526 = vmatpush1.msra.mxu0 %v1525
      %1527 = vmatprep.subr.mxu0 0.0
      %v1528 = vand.u32 %v1411, 4294901760
      %1529 = vmatpush1.msra.mxu0 %v1528
      %1530 = vmatprep.subr.mxu0 0.0
      %v1531 = vand.u32 %v1412, 4294901760
      %1532 = vmatpush1.msra.mxu0 %v1531
      %1533 = vmatprep.subr.mxu0 0.0
      %v1534 = vand.u32 %v1513, 4294901760
      %1535 = vmatpush1.msra.mxu0 %v1534
      %1536 = vmatprep.subr.mxu0 0.0
      %1537 = vmatpush1.msra.mxu0 0.0
      %1538 = vmatprep.subr.mxu0 0.0
      %1539 = vmatpush1.msra.mxu0 0.0
      %1540 = vmatprep.subr.mxu0 0.0
      %1541 = vmatpush1.msra.mxu0 0.0
      %1542 = vmatprep.subr.mxu0 0.0
      %1543 = vmatpush1.msra.mxu0 0.0
      %1544 = vmatprep.subr.mxu0 0.0
      %1545 = vmatpush1.msra.mxu0 0.0
      %1546 = vmatprep.subr.mxu0 0.0
      %1547 = vmatpush1.msra.mxu0 0.0
      %1548 = vmatprep.subr.mxu0 0.0
      %1549 = vmatpush1.msra.mxu0 0.0
      %1550 = vmatprep.subr.mxu0 0.0
      %1551 = vmatpush1.msra.mxu0 0.0
      %1552 = vmatprep.subr.mxu0 0.0
      %1553 = vmatpush1.msra.mxu0 0.0
      %1554 = vmatprep.subr.mxu0 0.0
      %1555 = vmatpush1.msra.mxu0 0.0
      %1556 = vmatprep.subr.mxu0 0.0
      %1557 = vmatpush1.msra.mxu0 0.0
      %1558 = vmatprep.subr.mxu0 0.0
      %1559 = vmatpush1.msra.mxu0 0.0
      %1560 = vmatprep.subr.mxu0 0.0
      %1561 = vmatpush1.msra.mxu0 0.0
      %1562 = vmatprep.subr.mxu0 0.0
      %1563 = vmatpush1.msra.mxu0 0.0
      %1564 = vmatprep.subr.mxu0 0.0
      %1565 = vmatpush1.msra.mxu0 0.0
      %1566 = vmatprep.subr.mxu0 0.0
      %1567 = vmatpush1.msra.mxu0 0.0
      %1568 = vmatprep.subr.mxu0 0.0
      %1569 = vmatpush1.msra.mxu0 0.0
      %1570 = vmatprep.subr.mxu0 0.0
      %1571 = vmatpush1.msra.mxu0 0.0
      %1572 = vmatprep.subr.mxu0 0.0
      %1573 = vmatpush1.msra.mxu0 0.0
      %1574 = vmatprep.subr.mxu0 0.0
      %1575 = vmatpush1.msra.mxu0 0.0
      %1576 = vmatprep.subr.mxu0 0.0
      %1577 = vmatpush1.msra.mxu0 0.0
      %1578 = vmatprep.subr.mxu0 0.0
      %1579 = vmatpush1.msra.mxu0 0.0
      %1580 = vmatprep.subr.mxu0 0.0
      %1581 = vmatpush1.msra.mxu0 0.0
      %1582 = vmatprep.subr.mxu0 0.0
      %1583 = vmatpush1.msra.mxu0 0.0
      %1584 = vmatprep.subr.mxu0 0.0
      %1585 = vmatpush1.msra.mxu0 0.0
      %1586 = vmatprep.mubr.f32.mxu0 0.0
      %v1587 = vand.u32 %v1464, 4294901760
      %v1588 = vsub.f32 %v1464, %v1587
      %v1589 = vand.u32 %v1588, 4294901760
      %v1590 = vsub.f32 %v1588, %v1589
      %v1591 = vand.u32 %v1590, 4294901760
      %1592 = vmatmul.mubr.f32.gmra.mrb[0].mxu0 %v1591
      %v1593 = vpop.f32.mrb[0].mxu0
      %v1594 = vadd.f32 0.0, %v1593
      %v1595 = vpop.f32.mrb[0].mxu0
      %1596 = vmatprep.mubr.f32.mxu0 0.0
      %v1597 = vand.u32 %v1467, 4294901760
      %v1598 = vsub.f32 %v1467, %v1597
      %v1599 = vand.u32 %v1598, 4294901760
      %v1600 = vsub.f32 %v1598, %v1599
      %v1601 = vand.u32 %v1600, 4294901760
      %1602 = vmatmul.mubr.f32.gmra.mrb[0].mxu0 %v1601
      %v1603 = vpop.f32.mrb[0].mxu0
      %v1604 = vadd.f32 0.0, %v1603
      %v1605 = vpop.f32.mrb[0].mxu0
      %1606 = vmatprep.mubr.f32.mxu0 0.0
      %v1607 = vand.u32 %v1470, 4294901760
      %v1608 = vsub.f32 %v1470, %v1607
      %v1609 = vand.u32 %v1608, 4294901760
      %v1610 = vsub.f32 %v1608, %v1609
      %v1611 = vand.u32 %v1610, 4294901760
      %1612 = vmatmul.mubr.f32.gmra.mrb[0].mxu0 %v1611
      %v1613 = vpop.f32.mrb[0].mxu0
      %v1614 = vadd.f32 0.0, %v1613
      %v1615 = vpop.f32.mrb[0].mxu0
      %1616 = vmatprep.mubr.f32.mxu0 0.0
      %v1617 = vand.u32 %v1473, 4294901760
      %v1618 = vsub.f32 %v1473, %v1617
      %v1619 = vand.u32 %v1618, 4294901760
      %v1620 = vsub.f32 %v1618, %v1619
      %v1621 = vand.u32 %v1620, 4294901760
      %1622 = vmatmul.mubr.f32.gmra.mrb[0].mxu0 %v1621
      %v1623 = vpop.f32.mrb[0].mxu0
      %v1624 = vadd.f32 0.0, %v1623
      %v1625 = vpop.f32.mrb[0].mxu0
      %1626 = vmatprep.mubr.f32.mxu0 0.0
      %v1627 = vand.u32 %v1476, 4294901760
      %v1628 = vsub.f32 %v1476, %v1627
      %v1629 = vand.u32 %v1628, 4294901760
      %v1630 = vsub.f32 %v1628, %v1629
      %v1631 = vand.u32 %v1630, 4294901760
      %1632 = vmatmul.mubr.f32.gmra.mrb[0].mxu0 %v1631
      %v1633 = vpop.f32.mrb[0].mxu0
      %v1634 = vadd.f32 0.0, %v1633
      %v1635 = vpop.f32.mrb[0].mxu0
      %1636 = vmatprep.mubr.f32.mxu0 0.0
      %v1637 = vand.u32 %v1479, 4294901760
      %v1638 = vsub.f32 %v1479, %v1637
      %v1639 = vand.u32 %v1638, 4294901760
      %v1640 = vsub.f32 %v1638, %v1639
      %v1641 = vand.u32 %v1640, 4294901760
      %1642 = vmatmul.mubr.f32.gmra.mrb[0].mxu0 %v1641
      %v1643 = vpop.f32.mrb[0].mxu0
      %v1644 = vadd.f32 0.0, %v1643
      %v1645 = vpop.f32.mrb[0].mxu0
      %1646 = vmatprep.mubr.f32.mxu0 0.0
      %v1647 = vand.u32 %v1482, 4294901760
      %v1648 = vsub.f32 %v1482, %v1647
      %v1649 = vand.u32 %v1648, 4294901760
      %v1650 = vsub.f32 %v1648, %v1649
      %v1651 = vand.u32 %v1650, 4294901760
      %1652 = vmatmul.mubr.f32.gmra.mrb[0].mxu0 %v1651
      %v1653 = vpop.f32.mrb[0].mxu0
      %v1654 = vadd.f32 0.0, %v1653
      %v1655 = vpop.f32.mrb[0].mxu0
      %1656 = vmatprep.mubr.f32.mxu0 0.0
      %v1657 = vand.u32 %v1485, 4294901760
      %v1658 = vsub.f32 %v1485, %v1657
      %v1659 = vand.u32 %v1658, 4294901760
      %v1660 = vsub.f32 %v1658, %v1659
      %v1661 = vand.u32 %v1660, 4294901760
      %1662 = vmatmul.mubr.f32.gmra.mrb[0].mxu0 %v1661
      %v1663 = vpop.f32.mrb[0].mxu0
      %v1664 = vadd.f32 0.0, %v1663
      %v1665 = vpop.f32.mrb[0].mxu0
      %1666 = vmatprep.mubr.f32.mxu0 0.0
      %v1667 = vand.u32 %v1488, 4294901760
      %v1668 = vsub.f32 %v1488, %v1667
      %v1669 = vand.u32 %v1668, 4294901760
      %v1670 = vsub.f32 %v1668, %v1669
      %v1671 = vand.u32 %v1670, 4294901760
      %1672 = vmatmul.mubr.f32.gmra.mrb[0].mxu0 %v1671
      %v1673 = vpop.f32.mrb[0].mxu0
      %v1674 = vadd.f32 0.0, %v1673
      %v1675 = vpop.f32.mrb[0].mxu0
      %1676 = vmatprep.mubr.f32.mxu0 0.0
      %v1677 = vand.u32 %v1491, 4294901760
      %v1678 = vsub.f32 %v1491, %v1677
      %v1679 = vand.u32 %v1678, 4294901760
      %v1680 = vsub.f32 %v1678, %v1679
      %v1681 = vand.u32 %v1680, 4294901760
      %1682 = vmatmul.mubr.f32.gmra.mrb[0].mxu0 %v1681
      %v1683 = vpop.f32.mrb[0].mxu0
      %v1684 = vadd.f32 0.0, %v1683
      %v1685 = vpop.f32.mrb[0].mxu0
      %1686 = vmatprep.mubr.f32.mxu0 0.0
      %v1687 = vand.u32 %v1494, 4294901760
      %v1688 = vsub.f32 %v1494, %v1687
      %v1689 = vand.u32 %v1688, 4294901760
      %v1690 = vsub.f32 %v1688, %v1689
      %v1691 = vand.u32 %v1690, 4294901760
      %1692 = vmatmul.mubr.f32.gmra.mrb[0].mxu0 %v1691
      %v1693 = vpop.f32.mrb[0].mxu0
      %v1694 = vadd.f32 0.0, %v1693
      %v1695 = vpop.f32.mrb[0].mxu0
      %1696 = vmatprep.mubr.f32.mxu0 0.0
      %v1697 = vand.u32 %v1497, 4294901760
      %v1698 = vsub.f32 %v1497, %v1697
      %v1699 = vand.u32 %v1698, 4294901760
      %v1700 = vsub.f32 %v1698, %v1699
      %v1701 = vand.u32 %v1700, 4294901760
      %1702 = vmatmul.mubr.f32.gmra.mrb[0].mxu0 %v1701
      %v1703 = vpop.f32.mrb[0].mxu0
      %v1704 = vadd.f32 0.0, %v1703
      %v1705 = vpop.f32.mrb[0].mxu0
      %1706 = vmatprep.mubr.f32.mxu0 0.0
      %v1707 = vand.u32 %v1500, 4294901760
      %v1708 = vsub.f32 %v1500, %v1707
      %v1709 = vand.u32 %v1708, 4294901760
      %v1710 = vsub.f32 %v1708, %v1709
      %v1711 = vand.u32 %v1710, 4294901760
      %1712 = vmatmul.mubr.f32.gmra.mrb[0].mxu0 %v1711
      %v1713 = vpop.f32.mrb[0].mxu0
      %v1714 = vadd.f32 0.0, %v1713
      %v1715 = vpop.f32.mrb[0].mxu0
      %1716 = vmatprep.mubr.f32.mxu0 0.0
      %v1717 = vand.u32 %v1503, 4294901760
      %v1718 = vsub.f32 %v1503, %v1717
      %v1719 = vand.u32 %v1718, 4294901760
      %v1720 = vsub.f32 %v1718, %v1719
      %v1721 = vand.u32 %v1720, 4294901760
      %1722 = vmatmul.mubr.f32.gmra.mrb[0].mxu0 %v1721
      %v1723 = vpop.f32.mrb[0].mxu0
      %v1724 = vadd.f32 0.0, %v1723
      %v1725 = vpop.f32.mrb[0].mxu0
      %1726 = vmatprep.mubr.f32.mxu0 0.0
      %v1727 = vand.u32 %v1506, 4294901760
      %v1728 = vsub.f32 %v1506, %v1727
      %v1729 = vand.u32 %v1728, 4294901760
      %v1730 = vsub.f32 %v1728, %v1729
      %v1731 = vand.u32 %v1730, 4294901760
      %1732 = vmatmul.mubr.f32.gmra.mrb[0].mxu0 %v1731
      %v1733 = vpop.f32.mrb[0].mxu0
      %v1734 = vadd.f32 0.0, %v1733
      %v1735 = vpop.f32.mrb[0].mxu0
      %1736 = vmatprep.mubr.f32.mxu0 0.0
      %v1737 = vand.u32 %v1509, 4294901760
      %v1738 = vsub.f32 %v1509, %v1737
      %v1739 = vand.u32 %v1738, 4294901760
      %v1740 = vsub.f32 %v1738, %v1739
      %v1741 = vand.u32 %v1740, 4294901760
      %1742 = vmatmul.mubr.f32.gmra.mrb[0].mxu0 %v1741
      %v1743 = vpop.f32.mrb[0].mxu0
      %v1744 = vadd.f32 0.0, %v1743
      %v1745 = vpop.f32.mrb[0].mxu0
      %1746 = vdwg.mxu0
      %1747 = vmatprep.subr.mxu0 0.0
      %v1748 = vand.u32 %v1407, 4294901760
      %v1749 = vsub.f32 %v1407, %v1748
      %v1750 = vand.u32 %v1749, 4294901760
      %v1751 = vsub.f32 %v1749, %v1750
      %v1752 = vand.u32 %v1751, 4294901760
      %1753 = vmatpush1.msra.mxu0 %v1752
      %1754 = vmatprep.subr.mxu0 0.0
      %v1755 = vand.u32 %v1408, 4294901760
      %v1756 = vsub.f32 %v1408, %v1755
      %v1757 = vand.u32 %v1756, 4294901760
      %v1758 = vsub.f32 %v1756, %v1757
      %v1759 = vand.u32 %v1758, 4294901760
      %1760 = vmatpush1.msra.mxu0 %v1759
      %1761 = vmatprep.subr.mxu0 0.0
      %v1762 = vand.u32 %v1409, 4294901760
      %v1763 = vsub.f32 %v1409, %v1762
      %v1764 = vand.u32 %v1763, 4294901760
      %v1765 = vsub.f32 %v1763, %v1764
      %v1766 = vand.u32 %v1765, 4294901760
      %1767 = vmatpush1.msra.mxu0 %v1766
      %1768 = vmatprep.subr.mxu0 0.0
      %v1769 = vand.u32 %v1410, 4294901760
      %v1770 = vsub.f32 %v1410, %v1769
      %v1771 = vand.u32 %v1770, 4294901760
      %v1772 = vsub.f32 %v1770, %v1771
      %v1773 = vand.u32 %v1772, 4294901760
      %1774 = vmatpush1.msra.mxu0 %v1773
      %1775 = vmatprep.subr.mxu0 0.0
      %v1776 = vand.u32 %v1411, 4294901760
      %v1777 = vsub.f32 %v1411, %v1776
      %v1778 = vand.u32 %v1777, 4294901760
      %v1779 = vsub.f32 %v1777, %v1778
      %v1780 = vand.u32 %v1779, 4294901760
      %1781 = vmatpush1.msra.mxu0 %v1780
      %1782 = vmatprep.subr.mxu0 0.0
      %v1783 = vand.u32 %v1412, 4294901760
      %v1784 = vsub.f32 %v1412, %v1783
      %v1785 = vand.u32 %v1784, 4294901760
      %v1786 = vsub.f32 %v1784, %v1785
      %v1787 = vand.u32 %v1786, 4294901760
      %1788 = vmatpush1.msra.mxu0 %v1787
      %1789 = vmatprep.subr.mxu0 0.0
      %v1790 = vand.u32 %v1513, 4294901760
      %v1791 = vsub.f32 %v1513, %v1790
      %v1792 = vand.u32 %v1791, 4294901760
      %v1793 = vsub.f32 %v1791, %v1792
      %v1794 = vand.u32 %v1793, 4294901760
      %1795 = vmatpush1.msra.mxu0 %v1794
      %1796 = vmatprep.subr.mxu0 0.0
      %1797 = vmatpush1.msra.mxu0 0.0
      %1798 = vmatprep.subr.mxu0 0.0
      %1799 = vmatpush1.msra.mxu0 0.0
      %1800 = vmatprep.subr.mxu0 0.0
      %1801 = vmatpush1.msra.mxu0 0.0
      %1802 = vmatprep.subr.mxu0 0.0
      %1803 = vmatpush1.msra.mxu0 0.0
      %1804 = vmatprep.subr.mxu0 0.0
      %1805 = vmatpush1.msra.mxu0 0.0
      %1806 = vmatprep.subr.mxu0 0.0
      %1807 = vmatpush1.msra.mxu0 0.0
      %1808 = vmatprep.subr.mxu0 0.0
      %1809 = vmatpush1.msra.mxu0 0.0
      %1810 = vmatprep.subr.mxu0 0.0
      %1811 = vmatpush1.msra.mxu0 0.0
      %1812 = vmatprep.subr.mxu0 0.0
      %1813 = vmatpush1.msra.mxu0 0.0
      %1814 = vmatprep.subr.mxu0 0.0
      %1815 = vmatpush1.msra.mxu0 0.0
      %1816 = vmatprep.subr.mxu0 0.0
      %1817 = vmatpush1.msra.mxu0 0.0
      %1818 = vmatprep.subr.mxu0 0.0
      %1819 = vmatpush1.msra.mxu0 0.0
      %1820 = vmatprep.subr.mxu0 0.0
      %1821 = vmatpush1.msra.mxu0 0.0
      %1822 = vmatprep.subr.mxu0 0.0
      %1823 = vmatpush1.msra.mxu0 0.0
      %1824 = vmatprep.subr.mxu0 0.0
      %1825 = vmatpush1.msra.mxu0 0.0
      %1826 = vmatprep.subr.mxu0 0.0
      %1827 = vmatpush1.msra.mxu0 0.0
      %1828 = vmatprep.subr.mxu0 0.0
      %1829 = vmatpush1.msra.mxu0 0.0
      %1830 = vmatprep.subr.mxu0 0.0
      %1831 = vmatpush1.msra.mxu0 0.0
      %1832 = vmatprep.subr.mxu0 0.0
      %1833 = vmatpush1.msra.mxu0 0.0
      %1834 = vmatprep.subr.mxu0 0.0
      %1835 = vmatpush1.msra.mxu0 0.0
      %1836 = vmatprep.subr.mxu0 0.0
      %1837 = vmatpush1.msra.mxu0 0.0
      %1838 = vmatprep.subr.mxu0 0.0
      %1839 = vmatpush1.msra.mxu0 0.0
      %1840 = vmatprep.subr.mxu0 0.0
      %1841 = vmatpush1.msra.mxu0 0.0
      %1842 = vmatprep.subr.mxu0 0.0
      %1843 = vmatpush1.msra.mxu0 0.0
      %1844 = vmatprep.subr.mxu0 0.0
      %1845 = vmatpush1.msra.mxu0 0.0
      %1846 = vmatprep.mubr.f32.mxu0 0.0
      %v1847 = vand.u32 %v1464, 4294901760
      %1848 = vmatmul.mubr.f32.gmra.mrb[0].mxu0 %v1847
      %v1849 = vpop.f32.mrb[0].mxu0
      %v1850 = vadd.f32 %v1594, %v1849
      %v1851 = vpop.f32.mrb[0].mxu0
      %1852 = vmatprep.mubr.f32.mxu0 0.0
      %v1853 = vand.u32 %v1467, 4294901760
      %1854 = vmatmul.mubr.f32.gmra.mrb[0].mxu0 %v1853
      %v1855 = vpop.f32.mrb[0].mxu0
      %v1856 = vadd.f32 %v1604, %v1855
      %v1857 = vpop.f32.mrb[0].mxu0
      %1858 = vmatprep.mubr.f32.mxu0 0.0
      %v1859 = vand.u32 %v1470, 4294901760
      %1860 = vmatmul.mubr.f32.gmra.mrb[0].mxu0 %v1859
      %v1861 = vpop.f32.mrb[0].mxu0
      %v1862 = vadd.f32 %v1614, %v1861
      %v1863 = vpop.f32.mrb[0].mxu0
      %1864 = vmatprep.mubr.f32.mxu0 0.0
      %v1865 = vand.u32 %v1473, 4294901760
      %1866 = vmatmul.mubr.f32.gmra.mrb[0].mxu0 %v1865
      %v1867 = vpop.f32.mrb[0].mxu0
      %v1868 = vadd.f32 %v1624, %v1867
      %v1869 = vpop.f32.mrb[0].mxu0
      %1870 = vmatprep.mubr.f32.mxu0 0.0
      %v1871 = vand.u32 %v1476, 4294901760
      %1872 = vmatmul.mubr.f32.gmra.mrb[0].mxu0 %v1871
      %v1873 = vpop.f32.mrb[0].mxu0
      %v1874 = vadd.f32 %v1634, %v1873
      %v1875 = vpop.f32.mrb[0].mxu0
      %1876 = vmatprep.mubr.f32.mxu0 0.0
      %v1877 = vand.u32 %v1479, 4294901760
      %1878 = vmatmul.mubr.f32.gmra.mrb[0].mxu0 %v1877
      %v1879 = vpop.f32.mrb[0].mxu0
      %v1880 = vadd.f32 %v1644, %v1879
      %v1881 = vpop.f32.mrb[0].mxu0
      %1882 = vmatprep.mubr.f32.mxu0 0.0
      %v1883 = vand.u32 %v1482, 4294901760
      %1884 = vmatmul.mubr.f32.gmra.mrb[0].mxu0 %v1883
      %v1885 = vpop.f32.mrb[0].mxu0
      %v1886 = vadd.f32 %v1654, %v1885
      %v1887 = vpop.f32.mrb[0].mxu0
      %1888 = vmatprep.mubr.f32.mxu0 0.0
      %v1889 = vand.u32 %v1485, 4294901760
      %1890 = vmatmul.mubr.f32.gmra.mrb[0].mxu0 %v1889
      %v1891 = vpop.f32.mrb[0].mxu0
      %v1892 = vadd.f32 %v1664, %v1891
      %v1893 = vpop.f32.mrb[0].mxu0
      %1894 = vmatprep.mubr.f32.mxu0 0.0
      %v1895 = vand.u32 %v1488, 4294901760
      %1896 = vmatmul.mubr.f32.gmra.mrb[0].mxu0 %v1895
      %v1897 = vpop.f32.mrb[0].mxu0
      %v1898 = vadd.f32 %v1674, %v1897
      %v1899 = vpop.f32.mrb[0].mxu0
      %1900 = vmatprep.mubr.f32.mxu0 0.0
      %v1901 = vand.u32 %v1491, 4294901760
      %1902 = vmatmul.mubr.f32.gmra.mrb[0].mxu0 %v1901
      %v1903 = vpop.f32.mrb[0].mxu0
      %v1904 = vadd.f32 %v1684, %v1903
      %v1905 = vpop.f32.mrb[0].mxu0
      %1906 = vmatprep.mubr.f32.mxu0 0.0
      %v1907 = vand.u32 %v1494, 4294901760
      %1908 = vmatmul.mubr.f32.gmra.mrb[0].mxu0 %v1907
      %v1909 = vpop.f32.mrb[0].mxu0
      %v1910 = vadd.f32 %v1694, %v1909
      %v1911 = vpop.f32.mrb[0].mxu0
      %1912 = vmatprep.mubr.f32.mxu0 0.0
      %v1913 = vand.u32 %v1497, 4294901760
      %1914 = vmatmul.mubr.f32.gmra.mrb[0].mxu0 %v1913
      %v1915 = vpop.f32.mrb[0].mxu0
      %v1916 = vadd.f32 %v1704, %v1915
      %v1917 = vpop.f32.mrb[0].mxu0
      %1918 = vmatprep.mubr.f32.mxu0 0.0
      %v1919 = vand.u32 %v1500, 4294901760
      %1920 = vmatmul.mubr.f32.gmra.mrb[0].mxu0 %v1919
      %v1921 = vpop.f32.mrb[0].mxu0
      %v1922 = vadd.f32 %v1714, %v1921
      %v1923 = vpop.f32.mrb[0].mxu0
      %1924 = vmatprep.mubr.f32.mxu0 0.0
      %v1925 = vand.u32 %v1503, 4294901760
      %1926 = vmatmul.mubr.f32.gmra.mrb[0].mxu0 %v1925
      %v1927 = vpop.f32.mrb[0].mxu0
      %v1928 = vadd.f32 %v1724, %v1927
      %v1929 = vpop.f32.mrb[0].mxu0
      %1930 = vmatprep.mubr.f32.mxu0 0.0
      %v1931 = vand.u32 %v1506, 4294901760
      %1932 = vmatmul.mubr.f32.gmra.mrb[0].mxu0 %v1931
      %v1933 = vpop.f32.mrb[0].mxu0
      %v1934 = vadd.f32 %v1734, %v1933
      %v1935 = vpop.f32.mrb[0].mxu0
      %1936 = vmatprep.mubr.f32.mxu0 0.0
      %v1937 = vand.u32 %v1509, 4294901760
      %1938 = vmatmul.mubr.f32.gmra.mrb[0].mxu0 %v1937
      %v1939 = vpop.f32.mrb[0].mxu0
      %v1940 = vadd.f32 %v1744, %v1939
      %v1941 = vpop.f32.mrb[0].mxu0
      %1942 = vdwg.mxu0
      %1943 = vmatprep.subr.mxu0 0.0
      %v1944 = vand.u32 %v1407, 4294901760
      %v1945 = vsub.f32 %v1407, %v1944
      %1946 = vmatpush1.msra.mxu0 %v1945
      %1947 = vmatprep.subr.mxu0 0.0
      %v1948 = vand.u32 %v1408, 4294901760
      %v1949 = vsub.f32 %v1408, %v1948
      %1950 = vmatpush1.msra.mxu0 %v1949
      %1951 = vmatprep.subr.mxu0 0.0
      %v1952 = vand.u32 %v1409, 4294901760
      %v1953 = vsub.f32 %v1409, %v1952
      %1954 = vmatpush1.msra.mxu0 %v1953
      %1955 = vmatprep.subr.mxu0 0.0
      %v1956 = vand.u32 %v1410, 4294901760
      %v1957 = vsub.f32 %v1410, %v1956
      %1958 = vmatpush1.msra.mxu0 %v1957
      %1959 = vmatprep.subr.mxu0 0.0
      %v1960 = vand.u32 %v1411, 4294901760
      %v1961 = vsub.f32 %v1411, %v1960
      %1962 = vmatpush1.msra.mxu0 %v1961
      %1963 = vmatprep.subr.mxu0 0.0
      %v1964 = vand.u32 %v1412, 4294901760
      %v1965 = vsub.f32 %v1412, %v1964
      %1966 = vmatpush1.msra.mxu0 %v1965
      %1967 = vmatprep.subr.mxu0 0.0
      %v1968 = vand.u32 %v1513, 4294901760
      %v1969 = vsub.f32 %v1513, %v1968
      %1970 = vmatpush1.msra.mxu0 %v1969
      %1971 = vmatprep.subr.mxu0 0.0
      %1972 = vmatpush1.msra.mxu0 0.0
      %1973 = vmatprep.subr.mxu0 0.0
      %1974 = vmatpush1.msra.mxu0 0.0
      %1975 = vmatprep.subr.mxu0 0.0
      %1976 = vmatpush1.msra.mxu0 0.0
      %1977 = vmatprep.subr.mxu0 0.0
      %1978 = vmatpush1.msra.mxu0 0.0
      %1979 = vmatprep.subr.mxu0 0.0
      %1980 = vmatpush1.msra.mxu0 0.0
      %1981 = vmatprep.subr.mxu0 0.0
      %1982 = vmatpush1.msra.mxu0 0.0
      %1983 = vmatprep.subr.mxu0 0.0
      %1984 = vmatpush1.msra.mxu0 0.0
      %1985 = vmatprep.subr.mxu0 0.0
      %1986 = vmatpush1.msra.mxu0 0.0
      %1987 = vmatprep.subr.mxu0 0.0
      %1988 = vmatpush1.msra.mxu0 0.0
      %1989 = vmatprep.subr.mxu0 0.0
      %1990 = vmatpush1.msra.mxu0 0.0
      %1991 = vmatprep.subr.mxu0 0.0
      %1992 = vmatpush1.msra.mxu0 0.0
      %1993 = vmatprep.subr.mxu0 0.0
      %1994 = vmatpush1.msra.mxu0 0.0
      %1995 = vmatprep.subr.mxu0 0.0
      %1996 = vmatpush1.msra.mxu0 0.0
      %1997 = vmatprep.subr.mxu0 0.0
      %1998 = vmatpush1.msra.mxu0 0.0
      %1999 = vmatprep.subr.mxu0 0.0
      %2000 = vmatpush1.msra.mxu0 0.0
      %2001 = vmatprep.subr.mxu0 0.0
      %2002 = vmatpush1.msra.mxu0 0.0
      %2003 = vmatprep.subr.mxu0 0.0
      %2004 = vmatpush1.msra.mxu0 0.0
      %2005 = vmatprep.subr.mxu0 0.0
      %2006 = vmatpush1.msra.mxu0 0.0
      %2007 = vmatprep.subr.mxu0 0.0
      %2008 = vmatpush1.msra.mxu0 0.0
      %2009 = vmatprep.subr.mxu0 0.0
      %2010 = vmatpush1.msra.mxu0 0.0
      %2011 = vmatprep.subr.mxu0 0.0
      %2012 = vmatpush1.msra.mxu0 0.0
      %2013 = vmatprep.subr.mxu0 0.0
      %2014 = vmatpush1.msra.mxu0 0.0
      %2015 = vmatprep.subr.mxu0 0.0
      %2016 = vmatpush1.msra.mxu0 0.0
      %2017 = vmatprep.subr.mxu0 0.0
      %2018 = vmatpush1.msra.mxu0 0.0
      %2019 = vmatprep.subr.mxu0 0.0
      %2020 = vmatpush1.msra.mxu0 0.0
      %2021 = vmatprep.mubr.f32.mxu0 0.0
      %v2022 = vand.u32 %v1464, 4294901760
      %v2023 = vsub.f32 %v1464, %v2022
      %2024 = vmatmul.mubr.f32.gmra.mrb[0].mxu0 %v2023
      %v2025 = vpop.f32.mrb[0].mxu0
      %v2026 = vadd.f32 %v1850, %v2025
      %v2027 = vpop.f32.mrb[0].mxu0
      %2028 = vmatprep.mubr.f32.mxu0 0.0
      %v2029 = vand.u32 %v1467, 4294901760
      %v2030 = vsub.f32 %v1467, %v2029
      %2031 = vmatmul.mubr.f32.gmra.mrb[0].mxu0 %v2030
      %v2032 = vpop.f32.mrb[0].mxu0
      %v2033 = vadd.f32 %v1856, %v2032
      %v2034 = vpop.f32.mrb[0].mxu0
      %2035 = vmatprep.mubr.f32.mxu0 0.0
      %v2036 = vand.u32 %v1470, 4294901760
      %v2037 = vsub.f32 %v1470, %v2036
      %2038 = vmatmul.mubr.f32.gmra.mrb[0].mxu0 %v2037
      %v2039 = vpop.f32.mrb[0].mxu0
      %v2040 = vadd.f32 %v1862, %v2039
      %v2041 = vpop.f32.mrb[0].mxu0
      %2042 = vmatprep.mubr.f32.mxu0 0.0
      %v2043 = vand.u32 %v1473, 4294901760
      %v2044 = vsub.f32 %v1473, %v2043
      %2045 = vmatmul.mubr.f32.gmra.mrb[0].mxu0 %v2044
      %v2046 = vpop.f32.mrb[0].mxu0
      %v2047 = vadd.f32 %v1868, %v2046
      %v2048 = vpop.f32.mrb[0].mxu0
      %2049 = vmatprep.mubr.f32.mxu0 0.0
      %v2050 = vand.u32 %v1476, 4294901760
      %v2051 = vsub.f32 %v1476, %v2050
      %2052 = vmatmul.mubr.f32.gmra.mrb[0].mxu0 %v2051
      %v2053 = vpop.f32.mrb[0].mxu0
      %v2054 = vadd.f32 %v1874, %v2053
      %v2055 = vpop.f32.mrb[0].mxu0
      %2056 = vmatprep.mubr.f32.mxu0 0.0
      %v2057 = vand.u32 %v1479, 4294901760
      %v2058 = vsub.f32 %v1479, %v2057
      %2059 = vmatmul.mubr.f32.gmra.mrb[0].mxu0 %v2058
      %v2060 = vpop.f32.mrb[0].mxu0
      %v2061 = vadd.f32 %v1880, %v2060
      %v2062 = vpop.f32.mrb[0].mxu0
      %2063 = vmatprep.mubr.f32.mxu0 0.0
      %v2064 = vand.u32 %v1482, 4294901760
      %v2065 = vsub.f32 %v1482, %v2064
      %2066 = vmatmul.mubr.f32.gmra.mrb[0].mxu0 %v2065
      %v2067 = vpop.f32.mrb[0].mxu0
      %v2068 = vadd.f32 %v1886, %v2067
      %v2069 = vpop.f32.mrb[0].mxu0
      %2070 = vmatprep.mubr.f32.mxu0 0.0
      %v2071 = vand.u32 %v1485, 4294901760
      %v2072 = vsub.f32 %v1485, %v2071
      %2073 = vmatmul.mubr.f32.gmra.mrb[0].mxu0 %v2072
      %v2074 = vpop.f32.mrb[0].mxu0
      %v2075 = vadd.f32 %v1892, %v2074
      %v2076 = vpop.f32.mrb[0].mxu0
      %2077 = vmatprep.mubr.f32.mxu0 0.0
      %v2078 = vand.u32 %v1488, 4294901760
      %v2079 = vsub.f32 %v1488, %v2078
      %2080 = vmatmul.mubr.f32.gmra.mrb[0].mxu0 %v2079
      %v2081 = vpop.f32.mrb[0].mxu0
      %v2082 = vadd.f32 %v1898, %v2081
      %v2083 = vpop.f32.mrb[0].mxu0
      %2084 = vmatprep.mubr.f32.mxu0 0.0
      %v2085 = vand.u32 %v1491, 4294901760
      %v2086 = vsub.f32 %v1491, %v2085
      %2087 = vmatmul.mubr.f32.gmra.mrb[0].mxu0 %v2086
      %v2088 = vpop.f32.mrb[0].mxu0
      %v2089 = vadd.f32 %v1904, %v2088
      %v2090 = vpop.f32.mrb[0].mxu0
      %2091 = vmatprep.mubr.f32.mxu0 0.0
      %v2092 = vand.u32 %v1494, 4294901760
      %v2093 = vsub.f32 %v1494, %v2092
      %2094 = vmatmul.mubr.f32.gmra.mrb[0].mxu0 %v2093
      %v2095 = vpop.f32.mrb[0].mxu0
      %v2096 = vadd.f32 %v1910, %v2095
      %v2097 = vpop.f32.mrb[0].mxu0
      %2098 = vmatprep.mubr.f32.mxu0 0.0
      %v2099 = vand.u32 %v1497, 4294901760
      %v2100 = vsub.f32 %v1497, %v2099
      %2101 = vmatmul.mubr.f32.gmra.mrb[0].mxu0 %v2100
      %v2102 = vpop.f32.mrb[0].mxu0
      %v2103 = vadd.f32 %v1916, %v2102
      %v2104 = vpop.f32.mrb[0].mxu0
      %2105 = vmatprep.mubr.f32.mxu0 0.0
      %v2106 = vand.u32 %v1500, 4294901760
      %v2107 = vsub.f32 %v1500, %v2106
      %2108 = vmatmul.mubr.f32.gmra.mrb[0].mxu0 %v2107
      %v2109 = vpop.f32.mrb[0].mxu0
      %v2110 = vadd.f32 %v1922, %v2109
      %v2111 = vpop.f32.mrb[0].mxu0
      %2112 = vmatprep.mubr.f32.mxu0 0.0
      %v2113 = vand.u32 %v1503, 4294901760
      %v2114 = vsub.f32 %v1503, %v2113
      %2115 = vmatmul.mubr.f32.gmra.mrb[0].mxu0 %v2114
      %v2116 = vpop.f32.mrb[0].mxu0
      %v2117 = vadd.f32 %v1928, %v2116
      %v2118 = vpop.f32.mrb[0].mxu0
      %2119 = vmatprep.mubr.f32.mxu0 0.0
      %v2120 = vand.u32 %v1506, 4294901760
      %v2121 = vsub.f32 %v1506, %v2120
      %2122 = vmatmul.mubr.f32.gmra.mrb[0].mxu0 %v2121
      %v2123 = vpop.f32.mrb[0].mxu0
      %v2124 = vadd.f32 %v1934, %v2123
      %v2125 = vpop.f32.mrb[0].mxu0
      %2126 = vmatprep.mubr.f32.mxu0 0.0
      %v2127 = vand.u32 %v1509, 4294901760
      %v2128 = vsub.f32 %v1509, %v2127
      %2129 = vmatmul.mubr.f32.gmra.mrb[0].mxu0 %v2128
      %v2130 = vpop.f32.mrb[0].mxu0
      %v2131 = vadd.f32 %v1940, %v2130
      %v2132 = vpop.f32.mrb[0].mxu0
      %2133 = vdwg.mxu0
      %2134 = vmatprep.subr.mxu0 0.0
      %v2135 = vand.u32 %v1407, 4294901760
      %2136 = vmatpush1.msra.mxu0 %v2135
      %2137 = vmatprep.subr.mxu0 0.0
      %v2138 = vand.u32 %v1408, 4294901760
      %2139 = vmatpush1.msra.mxu0 %v2138
      %2140 = vmatprep.subr.mxu0 0.0
      %v2141 = vand.u32 %v1409, 4294901760
      %2142 = vmatpush1.msra.mxu0 %v2141
      %2143 = vmatprep.subr.mxu0 0.0
      %v2144 = vand.u32 %v1410, 4294901760
      %2145 = vmatpush1.msra.mxu0 %v2144
      %2146 = vmatprep.subr.mxu0 0.0
      %v2147 = vand.u32 %v1411, 4294901760
      %2148 = vmatpush1.msra.mxu0 %v2147
      %2149 = vmatprep.subr.mxu0 0.0
      %v2150 = vand.u32 %v1412, 4294901760
      %2151 = vmatpush1.msra.mxu0 %v2150
      %2152 = vmatprep.subr.mxu0 0.0
      %v2153 = vand.u32 %v1513, 4294901760
      %2154 = vmatpush1.msra.mxu0 %v2153
      %2155 = vmatprep.subr.mxu0 0.0
      %2156 = vmatpush1.msra.mxu0 0.0
      %2157 = vmatprep.subr.mxu0 0.0
      %2158 = vmatpush1.msra.mxu0 0.0
      %2159 = vmatprep.subr.mxu0 0.0
      %2160 = vmatpush1.msra.mxu0 0.0
      %2161 = vmatprep.subr.mxu0 0.0
      %2162 = vmatpush1.msra.mxu0 0.0
      %2163 = vmatprep.subr.mxu0 0.0
      %2164 = vmatpush1.msra.mxu0 0.0
      %2165 = vmatprep.subr.mxu0 0.0
      %2166 = vmatpush1.msra.mxu0 0.0
      %2167 = vmatprep.subr.mxu0 0.0
      %2168 = vmatpush1.msra.mxu0 0.0
      %2169 = vmatprep.subr.mxu0 0.0
      %2170 = vmatpush1.msra.mxu0 0.0
      %2171 = vmatprep.subr.mxu0 0.0
      %2172 = vmatpush1.msra.mxu0 0.0
      %2173 = vmatprep.subr.mxu0 0.0
      %2174 = vmatpush1.msra.mxu0 0.0
      %2175 = vmatprep.subr.mxu0 0.0
      %2176 = vmatpush1.msra.mxu0 0.0
      %2177 = vmatprep.subr.mxu0 0.0
      %2178 = vmatpush1.msra.mxu0 0.0
      %2179 = vmatprep.subr.mxu0 0.0
      %2180 = vmatpush1.msra.mxu0 0.0
      %2181 = vmatprep.subr.mxu0 0.0
      %2182 = vmatpush1.msra.mxu0 0.0
      %2183 = vmatprep.subr.mxu0 0.0
      %2184 = vmatpush1.msra.mxu0 0.0
      %2185 = vmatprep.subr.mxu0 0.0
      %2186 = vmatpush1.msra.mxu0 0.0
      %2187 = vmatprep.subr.mxu0 0.0
      %2188 = vmatpush1.msra.mxu0 0.0
      %2189 = vmatprep.subr.mxu0 0.0
      %2190 = vmatpush1.msra.mxu0 0.0
      %2191 = vmatprep.subr.mxu0 0.0
      %2192 = vmatpush1.msra.mxu0 0.0
      %2193 = vmatprep.subr.mxu0 0.0
      %2194 = vmatpush1.msra.mxu0 0.0
      %2195 = vmatprep.subr.mxu0 0.0
      %2196 = vmatpush1.msra.mxu0 0.0
      %2197 = vmatprep.subr.mxu0 0.0
      %2198 = vmatpush1.msra.mxu0 0.0
      %2199 = vmatprep.subr.mxu0 0.0
      %2200 = vmatpush1.msra.mxu0 0.0
      %2201 = vmatprep.subr.mxu0 0.0
      %2202 = vmatpush1.msra.mxu0 0.0
      %2203 = vmatprep.subr.mxu0 0.0
      %2204 = vmatpush1.msra.mxu0 0.0
      %2205 = vmatprep.mubr.f32.mxu0 0.0
      %v2206 = vand.u32 %v1464, 4294901760
      %v2207 = vsub.f32 %v1464, %v2206
      %v2208 = vand.u32 %v2207, 4294901760
      %2209 = vmatmul.mubr.f32.gmra.mrb[0].mxu0 %v2208
      %v2210 = vpop.f32.mrb[0].mxu0
      %v2211 = vadd.f32 %v2026, %v2210
      %v2212 = vpop.f32.mrb[0].mxu0
      %2213 = vmatprep.mubr.f32.mxu0 0.0
      %v2214 = vand.u32 %v1467, 4294901760
      %v2215 = vsub.f32 %v1467, %v2214
      %v2216 = vand.u32 %v2215, 4294901760
      %2217 = vmatmul.mubr.f32.gmra.mrb[0].mxu0 %v2216
      %v2218 = vpop.f32.mrb[0].mxu0
      %v2219 = vadd.f32 %v2033, %v2218
      %v2220 = vpop.f32.mrb[0].mxu0
      %2221 = vmatprep.mubr.f32.mxu0 0.0
      %v2222 = vand.u32 %v1470, 4294901760
      %v2223 = vsub.f32 %v1470, %v2222
      %v2224 = vand.u32 %v2223, 4294901760
      %2225 = vmatmul.mubr.f32.gmra.mrb[0].mxu0 %v2224
      %v2226 = vpop.f32.mrb[0].mxu0
      %v2227 = vadd.f32 %v2040, %v2226
      %v2228 = vpop.f32.mrb[0].mxu0
      %2229 = vmatprep.mubr.f32.mxu0 0.0
      %v2230 = vand.u32 %v1473, 4294901760
      %v2231 = vsub.f32 %v1473, %v2230
      %v2232 = vand.u32 %v2231, 4294901760
      %2233 = vmatmul.mubr.f32.gmra.mrb[0].mxu0 %v2232
      %v2234 = vpop.f32.mrb[0].mxu0
      %v2235 = vadd.f32 %v2047, %v2234
      %v2236 = vpop.f32.mrb[0].mxu0
      %2237 = vmatprep.mubr.f32.mxu0 0.0
      %v2238 = vand.u32 %v1476, 4294901760
      %v2239 = vsub.f32 %v1476, %v2238
      %v2240 = vand.u32 %v2239, 4294901760
      %2241 = vmatmul.mubr.f32.gmra.mrb[0].mxu0 %v2240
      %v2242 = vpop.f32.mrb[0].mxu0
      %v2243 = vadd.f32 %v2054, %v2242
      %v2244 = vpop.f32.mrb[0].mxu0
      %2245 = vmatprep.mubr.f32.mxu0 0.0
      %v2246 = vand.u32 %v1479, 4294901760
      %v2247 = vsub.f32 %v1479, %v2246
      %v2248 = vand.u32 %v2247, 4294901760
      %2249 = vmatmul.mubr.f32.gmra.mrb[0].mxu0 %v2248
      %v2250 = vpop.f32.mrb[0].mxu0
      %v2251 = vadd.f32 %v2061, %v2250
      %v2252 = vpop.f32.mrb[0].mxu0
      %2253 = vmatprep.mubr.f32.mxu0 0.0
      %v2254 = vand.u32 %v1482, 4294901760
      %v2255 = vsub.f32 %v1482, %v2254
      %v2256 = vand.u32 %v2255, 4294901760
      %2257 = vmatmul.mubr.f32.gmra.mrb[0].mxu0 %v2256
      %v2258 = vpop.f32.mrb[0].mxu0
      %v2259 = vadd.f32 %v2068, %v2258
      %v2260 = vpop.f32.mrb[0].mxu0
      %2261 = vmatprep.mubr.f32.mxu0 0.0
      %v2262 = vand.u32 %v1485, 4294901760
      %v2263 = vsub.f32 %v1485, %v2262
      %v2264 = vand.u32 %v2263, 4294901760
      %2265 = vmatmul.mubr.f32.gmra.mrb[0].mxu0 %v2264
      %v2266 = vpop.f32.mrb[0].mxu0
      %v2267 = vadd.f32 %v2075, %v2266
      %v2268 = vpop.f32.mrb[0].mxu0
      %2269 = vmatprep.mubr.f32.mxu0 0.0
      %v2270 = vand.u32 %v1488, 4294901760
      %v2271 = vsub.f32 %v1488, %v2270
      %v2272 = vand.u32 %v2271, 4294901760
      %2273 = vmatmul.mubr.f32.gmra.mrb[0].mxu0 %v2272
      %v2274 = vpop.f32.mrb[0].mxu0
      %v2275 = vadd.f32 %v2082, %v2274
      %v2276 = vpop.f32.mrb[0].mxu0
      %2277 = vmatprep.mubr.f32.mxu0 0.0
      %v2278 = vand.u32 %v1491, 4294901760
      %v2279 = vsub.f32 %v1491, %v2278
      %v2280 = vand.u32 %v2279, 4294901760
      %2281 = vmatmul.mubr.f32.gmra.mrb[0].mxu0 %v2280
      %v2282 = vpop.f32.mrb[0].mxu0
      %v2283 = vadd.f32 %v2089, %v2282
      %v2284 = vpop.f32.mrb[0].mxu0
      %2285 = vmatprep.mubr.f32.mxu0 0.0
      %v2286 = vand.u32 %v1494, 4294901760
      %v2287 = vsub.f32 %v1494, %v2286
      %v2288 = vand.u32 %v2287, 4294901760
      %2289 = vmatmul.mubr.f32.gmra.mrb[0].mxu0 %v2288
      %v2290 = vpop.f32.mrb[0].mxu0
      %v2291 = vadd.f32 %v2096, %v2290
      %v2292 = vpop.f32.mrb[0].mxu0
      %2293 = vmatprep.mubr.f32.mxu0 0.0
      %v2294 = vand.u32 %v1497, 4294901760
      %v2295 = vsub.f32 %v1497, %v2294
      %v2296 = vand.u32 %v2295, 4294901760
      %2297 = vmatmul.mubr.f32.gmra.mrb[0].mxu0 %v2296
      %v2298 = vpop.f32.mrb[0].mxu0
      %v2299 = vadd.f32 %v2103, %v2298
      %v2300 = vpop.f32.mrb[0].mxu0
      %2301 = vmatprep.mubr.f32.mxu0 0.0
      %v2302 = vand.u32 %v1500, 4294901760
      %v2303 = vsub.f32 %v1500, %v2302
      %v2304 = vand.u32 %v2303, 4294901760
      %2305 = vmatmul.mubr.f32.gmra.mrb[0].mxu0 %v2304
      %v2306 = vpop.f32.mrb[0].mxu0
      %v2307 = vadd.f32 %v2110, %v2306
      %v2308 = vpop.f32.mrb[0].mxu0
      %2309 = vmatprep.mubr.f32.mxu0 0.0
      %v2310 = vand.u32 %v1503, 4294901760
      %v2311 = vsub.f32 %v1503, %v2310
      %v2312 = vand.u32 %v2311, 4294901760
      %2313 = vmatmul.mubr.f32.gmra.mrb[0].mxu0 %v2312
      %v2314 = vpop.f32.mrb[0].mxu0
      %v2315 = vadd.f32 %v2117, %v2314
      %v2316 = vpop.f32.mrb[0].mxu0
      %2317 = vmatprep.mubr.f32.mxu0 0.0
      %v2318 = vand.u32 %v1506, 4294901760
      %v2319 = vsub.f32 %v1506, %v2318
      %v2320 = vand.u32 %v2319, 4294901760
      %2321 = vmatmul.mubr.f32.gmra.mrb[0].mxu0 %v2320
      %v2322 = vpop.f32.mrb[0].mxu0
      %v2323 = vadd.f32 %v2124, %v2322
      %v2324 = vpop.f32.mrb[0].mxu0
      %2325 = vmatprep.mubr.f32.mxu0 0.0
      %v2326 = vand.u32 %v1509, 4294901760
      %v2327 = vsub.f32 %v1509, %v2326
      %v2328 = vand.u32 %v2327, 4294901760
      %2329 = vmatmul.mubr.f32.gmra.mrb[0].mxu0 %v2328
      %v2330 = vpop.f32.mrb[0].mxu0
      %v2331 = vadd.f32 %v2131, %v2330
      %v2332 = vpop.f32.mrb[0].mxu0
      %2333 = vdwg.mxu0
      %2334 = vmatprep.subr.mxu0 0.0
      %v2335 = vand.u32 %v1407, 4294901760
      %v2336 = vsub.f32 %v1407, %v2335
      %v2337 = vand.u32 %v2336, 4294901760
      %2338 = vmatpush1.msra.mxu0 %v2337
      %2339 = vmatprep.subr.mxu0 0.0
      %v2340 = vand.u32 %v1408, 4294901760
      %v2341 = vsub.f32 %v1408, %v2340
      %v2342 = vand.u32 %v2341, 4294901760
      %2343 = vmatpush1.msra.mxu0 %v2342
      %2344 = vmatprep.subr.mxu0 0.0
      %v2345 = vand.u32 %v1409, 4294901760
      %v2346 = vsub.f32 %v1409, %v2345
      %v2347 = vand.u32 %v2346, 4294901760
      %2348 = vmatpush1.msra.mxu0 %v2347
      %2349 = vmatprep.subr.mxu0 0.0
      %v2350 = vand.u32 %v1410, 4294901760
      %v2351 = vsub.f32 %v1410, %v2350
      %v2352 = vand.u32 %v2351, 4294901760
      %2353 = vmatpush1.msra.mxu0 %v2352
      %2354 = vmatprep.subr.mxu0 0.0
      %v2355 = vand.u32 %v1411, 4294901760
      %v2356 = vsub.f32 %v1411, %v2355
      %v2357 = vand.u32 %v2356, 4294901760
      %2358 = vmatpush1.msra.mxu0 %v2357
      %2359 = vmatprep.subr.mxu0 0.0
      %v2360 = vand.u32 %v1412, 4294901760
      %v2361 = vsub.f32 %v1412, %v2360
      %v2362 = vand.u32 %v2361, 4294901760
      %2363 = vmatpush1.msra.mxu0 %v2362
      %2364 = vmatprep.subr.mxu0 0.0
      %v2365 = vand.u32 %v1513, 4294901760
      %v2366 = vsub.f32 %v1513, %v2365
      %v2367 = vand.u32 %v2366, 4294901760
      %2368 = vmatpush1.msra.mxu0 %v2367
      %2369 = vmatprep.subr.mxu0 0.0
      %2370 = vmatpush1.msra.mxu0 0.0
      %2371 = vmatprep.subr.mxu0 0.0
      %2372 = vmatpush1.msra.mxu0 0.0
      %2373 = vmatprep.subr.mxu0 0.0
      %2374 = vmatpush1.msra.mxu0 0.0
      %2375 = vmatprep.subr.mxu0 0.0
      %2376 = vmatpush1.msra.mxu0 0.0
      %2377 = vmatprep.subr.mxu0 0.0
      %2378 = vmatpush1.msra.mxu0 0.0
      %2379 = vmatprep.subr.mxu0 0.0
      %2380 = vmatpush1.msra.mxu0 0.0
      %2381 = vmatprep.subr.mxu0 0.0
      %2382 = vmatpush1.msra.mxu0 0.0
      %2383 = vmatprep.subr.mxu0 0.0
      %2384 = vmatpush1.msra.mxu0 0.0
      %2385 = vmatprep.subr.mxu0 0.0
      %2386 = vmatpush1.msra.mxu0 0.0
      %2387 = vmatprep.subr.mxu0 0.0
      %2388 = vmatpush1.msra.mxu0 0.0
      %2389 = vmatprep.subr.mxu0 0.0
      %2390 = vmatpush1.msra.mxu0 0.0
      %2391 = vmatprep.subr.mxu0 0.0
      %2392 = vmatpush1.msra.mxu0 0.0
      %2393 = vmatprep.subr.mxu0 0.0
      %2394 = vmatpush1.msra.mxu0 0.0
      %2395 = vmatprep.subr.mxu0 0.0
      %2396 = vmatpush1.msra.mxu0 0.0
      %2397 = vmatprep.subr.mxu0 0.0
      %2398 = vmatpush1.msra.mxu0 0.0
      %2399 = vmatprep.subr.mxu0 0.0
      %2400 = vmatpush1.msra.mxu0 0.0
      %2401 = vmatprep.subr.mxu0 0.0
      %2402 = vmatpush1.msra.mxu0 0.0
      %2403 = vmatprep.subr.mxu0 0.0
      %2404 = vmatpush1.msra.mxu0 0.0
      %2405 = vmatprep.subr.mxu0 0.0
      %2406 = vmatpush1.msra.mxu0 0.0
      %2407 = vmatprep.subr.mxu0 0.0
      %2408 = vmatpush1.msra.mxu0 0.0
      %2409 = vmatprep.subr.mxu0 0.0
      %2410 = vmatpush1.msra.mxu0 0.0
      %2411 = vmatprep.subr.mxu0 0.0
      %2412 = vmatpush1.msra.mxu0 0.0
      %2413 = vmatprep.subr.mxu0 0.0
      %2414 = vmatpush1.msra.mxu0 0.0
      %2415 = vmatprep.subr.mxu0 0.0
      %2416 = vmatpush1.msra.mxu0 0.0
      %2417 = vmatprep.subr.mxu0 0.0
      %2418 = vmatpush1.msra.mxu0 0.0
      %2419 = vmatprep.mubr.f32.mxu0 0.0
      %v2420 = vand.u32 %v1464, 4294901760
      %2421 = vmatmul.mubr.f32.gmra.mrb[0].mxu0 %v2420
      %v2422 = vpop.f32.mrb[0].mxu0
      %v2423 = vadd.f32 %v2211, %v2422
      %v2424 = vpop.f32.mrb[0].mxu0
      %2425 = vmatprep.mubr.f32.mxu0 0.0
      %v2426 = vand.u32 %v1467, 4294901760
      %2427 = vmatmul.mubr.f32.gmra.mrb[0].mxu0 %v2426
      %v2428 = vpop.f32.mrb[0].mxu0
      %v2429 = vadd.f32 %v2219, %v2428
      %v2430 = vpop.f32.mrb[0].mxu0
      %2431 = vmatprep.mubr.f32.mxu0 0.0
      %v2432 = vand.u32 %v1470, 4294901760
      %2433 = vmatmul.mubr.f32.gmra.mrb[0].mxu0 %v2432
      %v2434 = vpop.f32.mrb[0].mxu0
      %v2435 = vadd.f32 %v2227, %v2434
      %v2436 = vpop.f32.mrb[0].mxu0
      %2437 = vmatprep.mubr.f32.mxu0 0.0
      %v2438 = vand.u32 %v1473, 4294901760
      %2439 = vmatmul.mubr.f32.gmra.mrb[0].mxu0 %v2438
      %v2440 = vpop.f32.mrb[0].mxu0
      %v2441 = vadd.f32 %v2235, %v2440
      %v2442 = vpop.f32.mrb[0].mxu0
      %2443 = vmatprep.mubr.f32.mxu0 0.0
      %v2444 = vand.u32 %v1476, 4294901760
      %2445 = vmatmul.mubr.f32.gmra.mrb[0].mxu0 %v2444
      %v2446 = vpop.f32.mrb[0].mxu0
      %v2447 = vadd.f32 %v2243, %v2446
      %v2448 = vpop.f32.mrb[0].mxu0
      %2449 = vmatprep.mubr.f32.mxu0 0.0
      %v2450 = vand.u32 %v1479, 4294901760
      %2451 = vmatmul.mubr.f32.gmra.mrb[0].mxu0 %v2450
      %v2452 = vpop.f32.mrb[0].mxu0
      %v2453 = vadd.f32 %v2251, %v2452
      %v2454 = vpop.f32.mrb[0].mxu0
      %2455 = vmatprep.mubr.f32.mxu0 0.0
      %v2456 = vand.u32 %v1482, 4294901760
      %2457 = vmatmul.mubr.f32.gmra.mrb[0].mxu0 %v2456
      %v2458 = vpop.f32.mrb[0].mxu0
      %v2459 = vadd.f32 %v2259, %v2458
      %v2460 = vpop.f32.mrb[0].mxu0
      %2461 = vmatprep.mubr.f32.mxu0 0.0
      %v2462 = vand.u32 %v1485, 4294901760
      %2463 = vmatmul.mubr.f32.gmra.mrb[0].mxu0 %v2462
      %v2464 = vpop.f32.mrb[0].mxu0
      %v2465 = vadd.f32 %v2267, %v2464
      %v2466 = vpop.f32.mrb[0].mxu0
      %2467 = vmatprep.mubr.f32.mxu0 0.0
      %v2468 = vand.u32 %v1488, 4294901760
      %2469 = vmatmul.mubr.f32.gmra.mrb[0].mxu0 %v2468
      %v2470 = vpop.f32.mrb[0].mxu0
      %v2471 = vadd.f32 %v2275, %v2470
      %v2472 = vpop.f32.mrb[0].mxu0
      %2473 = vmatprep.mubr.f32.mxu0 0.0
      %v2474 = vand.u32 %v1491, 4294901760
      %2475 = vmatmul.mubr.f32.gmra.mrb[0].mxu0 %v2474
      %v2476 = vpop.f32.mrb[0].mxu0
      %v2477 = vadd.f32 %v2283, %v2476
      %v2478 = vpop.f32.mrb[0].mxu0
      %2479 = vmatprep.mubr.f32.mxu0 0.0
      %v2480 = vand.u32 %v1494, 4294901760
      %2481 = vmatmul.mubr.f32.gmra.mrb[0].mxu0 %v2480
      %v2482 = vpop.f32.mrb[0].mxu0
      %v2483 = vadd.f32 %v2291, %v2482
      %v2484 = vpop.f32.mrb[0].mxu0
      %2485 = vmatprep.mubr.f32.mxu0 0.0
      %v2486 = vand.u32 %v1497, 4294901760
      %2487 = vmatmul.mubr.f32.gmra.mrb[0].mxu0 %v2486
      %v2488 = vpop.f32.mrb[0].mxu0
      %v2489 = vadd.f32 %v2299, %v2488
      %v2490 = vpop.f32.mrb[0].mxu0
      %2491 = vmatprep.mubr.f32.mxu0 0.0
      %v2492 = vand.u32 %v1500, 4294901760
      %2493 = vmatmul.mubr.f32.gmra.mrb[0].mxu0 %v2492
      %v2494 = vpop.f32.mrb[0].mxu0
      %v2495 = vadd.f32 %v2307, %v2494
      %v2496 = vpop.f32.mrb[0].mxu0
      %2497 = vmatprep.mubr.f32.mxu0 0.0
      %v2498 = vand.u32 %v1503, 4294901760
      %2499 = vmatmul.mubr.f32.gmra.mrb[0].mxu0 %v2498
      %v2500 = vpop.f32.mrb[0].mxu0
      %v2501 = vadd.f32 %v2315, %v2500
      %v2502 = vpop.f32.mrb[0].mxu0
      %2503 = vmatprep.mubr.f32.mxu0 0.0
      %v2504 = vand.u32 %v1506, 4294901760
      %2505 = vmatmul.mubr.f32.gmra.mrb[0].mxu0 %v2504
      %v2506 = vpop.f32.mrb[0].mxu0
      %v2507 = vadd.f32 %v2323, %v2506
      %v2508 = vpop.f32.mrb[0].mxu0
      %2509 = vmatprep.mubr.f32.mxu0 0.0
      %v2510 = vand.u32 %v1509, 4294901760
      %2511 = vmatmul.mubr.f32.gmra.mrb[0].mxu0 %v2510
      %v2512 = vpop.f32.mrb[0].mxu0
      %v2513 = vadd.f32 %v2331, %v2512
      %v2514 = vpop.f32.mrb[0].mxu0
      %2515 = vdwg.mxu0
      %2516 = vmatprep.subr.mxu0 0.0
      %v2517 = vand.u32 %v1407, 4294901760
      %2518 = vmatpush1.msra.mxu0 %v2517
      %2519 = vmatprep.subr.mxu0 0.0
      %v2520 = vand.u32 %v1408, 4294901760
      %2521 = vmatpush1.msra.mxu0 %v2520
      %2522 = vmatprep.subr.mxu0 0.0
      %v2523 = vand.u32 %v1409, 4294901760
      %2524 = vmatpush1.msra.mxu0 %v2523
      %2525 = vmatprep.subr.mxu0 0.0
      %v2526 = vand.u32 %v1410, 4294901760
      %2527 = vmatpush1.msra.mxu0 %v2526
      %2528 = vmatprep.subr.mxu0 0.0
      %v2529 = vand.u32 %v1411, 4294901760
      %2530 = vmatpush1.msra.mxu0 %v2529
      %2531 = vmatprep.subr.mxu0 0.0
      %v2532 = vand.u32 %v1412, 4294901760
      %2533 = vmatpush1.msra.mxu0 %v2532
      %2534 = vmatprep.subr.mxu0 0.0
      %v2535 = vand.u32 %v1513, 4294901760
      %2536 = vmatpush1.msra.mxu0 %v2535
      %2537 = vmatprep.subr.mxu0 0.0
      %2538 = vmatpush1.msra.mxu0 0.0
      %2539 = vmatprep.subr.mxu0 0.0
      %2540 = vmatpush1.msra.mxu0 0.0
      %2541 = vmatprep.subr.mxu0 0.0
      %2542 = vmatpush1.msra.mxu0 0.0
      %2543 = vmatprep.subr.mxu0 0.0
      %2544 = vmatpush1.msra.mxu0 0.0
      %2545 = vmatprep.subr.mxu0 0.0
      %2546 = vmatpush1.msra.mxu0 0.0
      %2547 = vmatprep.subr.mxu0 0.0
      %2548 = vmatpush1.msra.mxu0 0.0
      %2549 = vmatprep.subr.mxu0 0.0
      %2550 = vmatpush1.msra.mxu0 0.0
      %2551 = vmatprep.subr.mxu0 0.0
      %2552 = vmatpush1.msra.mxu0 0.0
      %2553 = vmatprep.subr.mxu0 0.0
      %2554 = vmatpush1.msra.mxu0 0.0
      %2555 = vmatprep.subr.mxu0 0.0
      %2556 = vmatpush1.msra.mxu0 0.0
      %2557 = vmatprep.subr.mxu0 0.0
      %2558 = vmatpush1.msra.mxu0 0.0
      %2559 = vmatprep.subr.mxu0 0.0
      %2560 = vmatpush1.msra.mxu0 0.0
      %2561 = vmatprep.subr.mxu0 0.0
      %2562 = vmatpush1.msra.mxu0 0.0
      %2563 = vmatprep.subr.mxu0 0.0
      %2564 = vmatpush1.msra.mxu0 0.0
      %2565 = vmatprep.subr.mxu0 0.0
      %2566 = vmatpush1.msra.mxu0 0.0
      %2567 = vmatprep.subr.mxu0 0.0
      %2568 = vmatpush1.msra.mxu0 0.0
      %2569 = vmatprep.subr.mxu0 0.0
      %2570 = vmatpush1.msra.mxu0 0.0
      %2571 = vmatprep.subr.mxu0 0.0
      %2572 = vmatpush1.msra.mxu0 0.0
      %2573 = vmatprep.subr.mxu0 0.0
      %2574 = vmatpush1.msra.mxu0 0.0
      %2575 = vmatprep.subr.mxu0 0.0
      %2576 = vmatpush1.msra.mxu0 0.0
      %2577 = vmatprep.subr.mxu0 0.0
      %2578 = vmatpush1.msra.mxu0 0.0
      %2579 = vmatprep.subr.mxu0 0.0
      %2580 = vmatpush1.msra.mxu0 0.0
      %2581 = vmatprep.subr.mxu0 0.0
      %2582 = vmatpush1.msra.mxu0 0.0
      %2583 = vmatprep.subr.mxu0 0.0
      %2584 = vmatpush1.msra.mxu0 0.0
      %2585 = vmatprep.subr.mxu0 0.0
      %2586 = vmatpush1.msra.mxu0 0.0
      %2587 = vmatprep.mubr.f32.mxu0 0.0
      %v2588 = vand.u32 %v1464, 4294901760
      %2589 = vmatmul.mubr.f32.gmra.mrb[0].mxu0 %v2588
      %v2590 = vpop.f32.mrb[0].mxu0
      %v2591 = vadd.f32 %v2423, %v2590
      %v2592 = vpop.f32.mrb[0].mxu0
      %2593 = vmatprep.mubr.f32.mxu0 0.0
      %v2594 = vand.u32 %v1467, 4294901760
      %2595 = vmatmul.mubr.f32.gmra.mrb[0].mxu0 %v2594
      %v2596 = vpop.f32.mrb[0].mxu0
      %v2597 = vadd.f32 %v2429, %v2596
      %v2598 = vpop.f32.mrb[0].mxu0
      %2599 = vmatprep.mubr.f32.mxu0 0.0
      %v2600 = vand.u32 %v1470, 4294901760
      %2601 = vmatmul.mubr.f32.gmra.mrb[0].mxu0 %v2600
      %v2602 = vpop.f32.mrb[0].mxu0
      %v2603 = vadd.f32 %v2435, %v2602
      %v2604 = vpop.f32.mrb[0].mxu0
      %2605 = vmatprep.mubr.f32.mxu0 0.0
      %v2606 = vand.u32 %v1473, 4294901760
      %2607 = vmatmul.mubr.f32.gmra.mrb[0].mxu0 %v2606
      %v2608 = vpop.f32.mrb[0].mxu0
      %v2609 = vadd.f32 %v2441, %v2608
      %v2610 = vpop.f32.mrb[0].mxu0
      %2611 = vmatprep.mubr.f32.mxu0 0.0
      %v2612 = vand.u32 %v1476, 4294901760
      %2613 = vmatmul.mubr.f32.gmra.mrb[0].mxu0 %v2612
      %v2614 = vpop.f32.mrb[0].mxu0
      %v2615 = vadd.f32 %v2447, %v2614
      %v2616 = vpop.f32.mrb[0].mxu0
      %2617 = vmatprep.mubr.f32.mxu0 0.0
      %v2618 = vand.u32 %v1479, 4294901760
      %2619 = vmatmul.mubr.f32.gmra.mrb[0].mxu0 %v2618
      %v2620 = vpop.f32.mrb[0].mxu0
      %v2621 = vadd.f32 %v2453, %v2620
      %v2622 = vpop.f32.mrb[0].mxu0
      %2623 = vmatprep.mubr.f32.mxu0 0.0
      %v2624 = vand.u32 %v1482, 4294901760
      %2625 = vmatmul.mubr.f32.gmra.mrb[0].mxu0 %v2624
      %v2626 = vpop.f32.mrb[0].mxu0
      %v2627 = vadd.f32 %v2459, %v2626
      %v2628 = vpop.f32.mrb[0].mxu0
      %2629 = vmatprep.mubr.f32.mxu0 0.0
      %v2630 = vand.u32 %v1485, 4294901760
      %2631 = vmatmul.mubr.f32.gmra.mrb[0].mxu0 %v2630
      %v2632 = vpop.f32.mrb[0].mxu0
      %v2633 = vadd.f32 %v2465, %v2632
      %v2634 = vpop.f32.mrb[0].mxu0
      %2635 = vmatprep.mubr.f32.mxu0 0.0
      %v2636 = vand.u32 %v1488, 4294901760
      %2637 = vmatmul.mubr.f32.gmra.mrb[0].mxu0 %v2636
      %v2638 = vpop.f32.mrb[0].mxu0
      %v2639 = vadd.f32 %v2471, %v2638
      %v2640 = vpop.f32.mrb[0].mxu0
      %2641 = vmatprep.mubr.f32.mxu0 0.0
      %v2642 = vand.u32 %v1491, 4294901760
      %2643 = vmatmul.mubr.f32.gmra.mrb[0].mxu0 %v2642
      %v2644 = vpop.f32.mrb[0].mxu0
      %v2645 = vadd.f32 %v2477, %v2644
      %v2646 = vpop.f32.mrb[0].mxu0
      %2647 = vmatprep.mubr.f32.mxu0 0.0
      %v2648 = vand.u32 %v1494, 4294901760
      %2649 = vmatmul.mubr.f32.gmra.mrb[0].mxu0 %v2648
      %v2650 = vpop.f32.mrb[0].mxu0
      %v2651 = vadd.f32 %v2483, %v2650
      %v2652 = vpop.f32.mrb[0].mxu0
      %2653 = vmatprep.mubr.f32.mxu0 0.0
      %v2654 = vand.u32 %v1497, 4294901760
      %2655 = vmatmul.mubr.f32.gmra.mrb[0].mxu0 %v2654
      %v2656 = vpop.f32.mrb[0].mxu0
      %v2657 = vadd.f32 %v2489, %v2656
      %v2658 = vpop.f32.mrb[0].mxu0
      %2659 = vmatprep.mubr.f32.mxu0 0.0
      %v2660 = vand.u32 %v1500, 4294901760
      %2661 = vmatmul.mubr.f32.gmra.mrb[0].mxu0 %v2660
      %v2662 = vpop.f32.mrb[0].mxu0
      %v2663 = vadd.f32 %v2495, %v2662
      %v2664 = vpop.f32.mrb[0].mxu0
      %2665 = vmatprep.mubr.f32.mxu0 0.0
      %v2666 = vand.u32 %v1503, 4294901760
      %2667 = vmatmul.mubr.f32.gmra.mrb[0].mxu0 %v2666
      %v2668 = vpop.f32.mrb[0].mxu0
      %v2669 = vadd.f32 %v2501, %v2668
      %v2670 = vpop.f32.mrb[0].mxu0
      %2671 = vmatprep.mubr.f32.mxu0 0.0
      %v2672 = vand.u32 %v1506, 4294901760
      %2673 = vmatmul.mubr.f32.gmra.mrb[0].mxu0 %v2672
      %v2674 = vpop.f32.mrb[0].mxu0
      %v2675 = vadd.f32 %v2507, %v2674
      %v2676 = vpop.f32.mrb[0].mxu0
      %2677 = vmatprep.mubr.f32.mxu0 0.0
      %v2678 = vand.u32 %v1509, 4294901760
      %2679 = vmatmul.mubr.f32.gmra.mrb[0].mxu0 %v2678
      %v2680 = vpop.f32.mrb[0].mxu0
      %v2681 = vadd.f32 %v2513, %v2680
      %v2682 = vpop.f32.mrb[0].mxu0
      %2683 = vdwg.mxu0
      %v2684 = vadd.f32 %v1414, %v2591
      %v2685 = vadd.f32 %v1415, %v2597
      %v2686 = vadd.f32 %v1416, %v2603
      %v2687 = vadd.f32 %v1417, %v2609
      %v2688 = vadd.f32 %v1418, %v2615
      %v2689 = vadd.f32 %v1419, %v2621
      %v2690 = vadd.f32 %v1420, %v2627
      %v2691 = vadd.f32 %v1421, %v2633
      %v2692 = vadd.f32 %v1422, %v2639
      %v2693 = vadd.f32 %v1423, %v2645
      %v2694 = vadd.f32 %v1424, %v2651
      %v2695 = vadd.f32 %v1425, %v2657
      %v2696 = vadd.f32 %v1426, %v2663
      %v2697 = vadd.f32 %v1427, %v2669
      %v2698 = vadd.f32 %v1428, %v2675
      %v2699 = vadd.f32 %v1429, %v2681
      %2700 = vst [vmem:[#allocation7] sm:$0xff] %v2684
      %2701 = vst [vmem:[#allocation7 + $0x8] sm:$0xff] %v2685
      %2702 = vst [vmem:[#allocation7 + $0x10] sm:$0xff] %v2686
      %2703 = vst [vmem:[#allocation7 + $0x18] sm:$0xff] %v2687
      %2704 = vst [vmem:[#allocation7 + $0x20] sm:$0xff] %v2688
      %2705 = vst [vmem:[#allocation7 + $0x28] sm:$0xff] %v2689
      %2706 = vst [vmem:[#allocation7 + $0x30] sm:$0xff] %v2690
      %2707 = vst [vmem:[#allocation7 + $0x38] sm:$0xff] %v2691
      %2708 = vst [vmem:[#allocation7 + $0x40] sm:$0xff] %v2692
      %2709 = vst [vmem:[#allocation7 + $0x48] sm:$0xff] %v2693
      %2710 = vst [vmem:[#allocation7 + $0x50] sm:$0xff] %v2694
      %2711 = vst [vmem:[#allocation7 + $0x58] sm:$0xff] %v2695
      %2712 = vst [vmem:[#allocation7 + $0x60] sm:$0xff] %v2696
      %2713 = vst [vmem:[#allocation7 + $0x68] sm:$0xff] %v2697
      %2714 = vst [vmem:[#allocation7 + $0x70] sm:$0xff] %v2698
      %2715 = vst [vmem:[#allocation7 + $0x78] sm:$0xff] %v2699
    $region21: #{tpu_custom_call.1} parent=1 // pred_fallthru
      _
    // Predicated region
    $region22: #{tpu_custom_call.1} parent=1 // pred_check
      _
    $region23: #{tpu_custom_call.1} parent=1 // pred_check_branch
      %2717 = sbr.rel (0) target = $region25
    $region24: #{tpu_custom_call.1} parent=1 // pred_region
      %s2719 = ssub.s32 2048, 2048
      %2720 = vsyncadd [#allocation6], %s2719
      %s2721 = sshll.u32 [#allocation7], 4
      %s2722 = int_to_ptr.vmem [resolvable:$true] %s2721
      %2727 = dma.vmem_to_hbm [thread:$0]  %s2722, 2048, %s2, [#allocation6], 128, 128, 8
    $region25: #{tpu_custom_call.1} parent=1 // pred_fallthru
      _
    // Predicated region
    $region26: #{tpu_custom_call.1} parent=1 // pred_check
      _
    $region27: #{tpu_custom_call.1} parent=1 // pred_check_branch
      %2729 = sbr.rel (0) target = $region29
    $region28: #{tpu_custom_call.1} parent=1 // pred_region
      %2730 = dma.done [#allocation6], 2048
    $region29: #{tpu_custom_call.1} parent=1 // pred_fallthru
      _
    %2731 = vsyncpa [#allocation5], 1
    %2732 = vsyncpa [#allocation6], 1

</llo_original>
